<compile_context>
chip_gen: v7x
topology: tpu7x:2x2x1
jax: 0.10.0
libtpu: 0.0.40
codegen_flags: <defaults>
</compile_context>

<pallas_src>
import functools

import jax
import jax.numpy as jnp
from jax.experimental import pallas as pl
from jax.experimental.pallas import tpu as pltpu


def _round_up(v, m):
    return (v + m - 1) // m * m


def _vmem_limit_bytes(block_bytes):
    """Scoped-VMEM budget from the actual per-step block footprint (double-buffered)
    plus headroom for in-kernel temporaries; stays well under v7x's 64 MiB VMEM."""
    need = 2 * block_bytes
    return int(min(48 * 1024 * 1024, max(8 * 1024 * 1024, 8 * need)))


# ---------------------------------------------------------------------------
# Kernels
# ---------------------------------------------------------------------------

def _block_s1_kernel(xp_ref, dwl_ref, b1l_ref, pwg_ref, b2l_ref, out_ref, *, C, Wg):
    """Block(stride=1) for one batch element.

    xp_ref : (Hp, Wp*C)    bf16 padded image, lane = j*C + c
    dwl_ref: (9, W*C)      f32  depthwise weights (BN1 scale folded, lane-tiled)
    b1l_ref: (1, W*C)      f32  folded BN1 bias (lane-tiled)
    pwg_ref: (Wg*C, Wg*Co) bf16 block-diagonal pointwise weights (BN2 scale folded)
    b2l_ref: (1, W*Co)     f32  folded BN2 bias (lane-tiled)
    out_ref: (H, W*Co)     f32  lane-dense output
    """
    Hp, Wl = xp_ref.shape
    H, _ = out_ref.shape
    WC = dwl_ref.shape[1]
    G = (WC // C) // Wg
    KG = Wg * C

    xv = xp_ref[...].astype(jnp.float32)
    dwl = dwl_ref[...]

    # --- depthwise 3x3, stride 1, pad 1 (BN1 bias folded into the acc init) ---
    acc = None
    ti = 0
    for kh in range(3):
        # output row i needs input row i+kh  ->  roll rows so rolled[i] = x[i+kh]
        row = xv if kh == 0 else pltpu.roll(xv, Hp - kh, axis=0)
        for kw in range(3):
            # output lane j*C+c needs input lane (j+kw)*C+c  ->  roll lanes by kw*C
            tap = row if kw == 0 else pltpu.roll(row, Wl - kw * C, axis=1)
            term = tap[:H, :WC] * dwl[ti:ti + 1, :]
            acc = (b1l_ref[...] + term) if acc is None else acc + term
            ti += 1
    hact = jnp.clip(acc, 0.0, 6.0).astype(jnp.bfloat16)            # ReLU6, (H, W*C)

    # --- pointwise 1x1 conv on the MXU (bf16 operands, f32 accumulate) ---
    pwg = pwg_ref[...]
    h2 = jnp.concatenate(
        [jnp.dot(hact[:, g * KG:(g + 1) * KG], pwg,
                 preferred_element_type=jnp.float32) for g in range(G)],
        axis=1)                                                     # (H, W*Co), packed
    out_ref[...] = jnp.clip(h2 + b2l_ref[...], 0.0, 6.0).astype(out_ref.dtype)


def _decision_s2_kernel(x00_ref, x01_ref, x10_ref, x11_ref,
                        dwl_ref, b1l_ref, pwg_ref, b2l_ref,
                        sel_ref, w1_ref, fb1_ref, w2_ref, fb2_ref,
                        out_ref, dec_ref, *, C, Wg, hw_count):
    """Block(stride=2) + SE/avg-pool decision branch for one batch element.

    x??_ref: (Hp2, Wp2*C) bf16 (row,col)-parity sub-grids of the padded image
    out_ref: (Ho, Wo*Co)  f32 lane-dense output;  dec_ref: (1, C)
    """
    Hp2, Wl2 = x00_ref.shape
    Ho, _ = out_ref.shape
    WoC = dwl_ref.shape[1]
    G = (WoC // C) // Wg
    KG = Wg * C

    xs = [[x00_ref[...].astype(jnp.float32), x01_ref[...].astype(jnp.float32)],
          [x10_ref[...].astype(jnp.float32), x11_ref[...].astype(jnp.float32)]]
    dwl = dwl_ref[...]

    # --- depthwise 3x3, stride 2, pad 1 on parity slabs (all shifts are rolls by 1) ---
    acc = None
    ti = 0
    for kh in range(3):
        for kw in range(3):
            t = xs[kh % 2][kw % 2]
            if kh // 2:                                   # needs parity row i+1
                t = pltpu.roll(t, Hp2 - 1, axis=0)
            if kw // 2:                                   # needs parity col j+1 (C lanes)
                t = pltpu.roll(t, Wl2 - C, axis=1)
            term = t[:Ho, :WoC] * dwl[ti:ti + 1, :]
            acc = (b1l_ref[...] + term) if acc is None else acc + term
            ti += 1
    hact = jnp.clip(acc, 0.0, 6.0).astype(jnp.bfloat16)            # (Ho, Wo*C)

    # --- pointwise 1x1 conv on the MXU ---
    pwg = pwg_ref[...]
    h2 = jnp.concatenate(
        [jnp.dot(hact[:, g * KG:(g + 1) * KG], pwg,
                 preferred_element_type=jnp.float32) for g in range(G)],
        axis=1)                                                     # (Ho, Wo*Co)
    out_ref[...] = jnp.clip(h2 + b2l_ref[...], 0.0, 6.0).astype(out_ref.dtype)

    # --- decision branch: AdaptiveAvgPool(1)(SELayer(x)) for this batch element ---
    # (zero padding contributes 0 to the sums; sel reduces packed lanes -> channels)
    rowsum = (jnp.sum(xs[0][0], axis=0, keepdims=True)
              + jnp.sum(xs[0][1], axis=0, keepdims=True)
              + jnp.sum(xs[1][0], axis=0, keepdims=True)
              + jnp.sum(xs[1][1], axis=0, keepdims=True))           # (1, Wl2)
    xmean = jnp.dot(rowsum, sel_ref[...],
                    preferred_element_type=jnp.float32) * (1.0 / hw_count)   # (1, C)
    z = jnp.maximum(
        jnp.dot(xmean, w1_ref[...], preferred_element_type=jnp.float32) + fb1_ref[...],
        0.0)
    z = jnp.dot(z, w2_ref[...], preferred_element_type=jnp.float32) + fb2_ref[...]
    # avg_pool(x * per-channel gate) == avg_pool(x) * gate
    dec_ref[...] = (xmean * jax.nn.sigmoid(z)).astype(dec_ref.dtype)


# ---------------------------------------------------------------------------
# Decision module (JAX / Pallas)
# ---------------------------------------------------------------------------

class DecisionPallas:
    def __init__(self, inplanes, outplanes, stride, key, add=None):
        assert stride in (1, 2)
        self.inplanes, self.outplanes, self.stride = inplanes, outplanes, stride
        self.Ch = max(inplanes // 16, 1)          # SE reduction = 16
        self.add = [] if add is None else add
        self._init_params(key)
        self._fwd = jax.jit(self._forward_s2_impl if stride == 2 else self._forward_s1_impl)

    def _init_params(self, key):
        # Deterministic synthetic parameters matching the PyTorch module's shapes.
        C, Co, Ch = self.inplanes, self.outplanes, self.Ch
        eps = 1e-5
        f32 = jnp.float32
        ks = jax.random.split(key, 16)
        dw = 0.2 * jax.random.normal(ks[0], (3, 3, C), f32)         # conv1 (C,1,3,3) -> (3,3,C)
        g1 = 1.0 + 0.1 * jax.random.normal(ks[1], (C,), f32)
        be1 = 0.1 * jax.random.normal(ks[2], (C,), f32)
        m1 = 0.05 * jax.random.normal(ks[3], (C,), f32)
        v1 = 1.0 + 0.1 * jnp.abs(jax.random.normal(ks[4], (C,), f32))
        pw = 0.2 * jax.random.normal(ks[5], (C, Co), f32)           # conv2 (Co,C,1,1) -> (C,Co)
        g2 = 1.0 + 0.1 * jax.random.normal(ks[6], (Co,), f32)
        be2 = 0.1 * jax.random.normal(ks[7], (Co,), f32)
        m2 = 0.05 * jax.random.normal(ks[8], (Co,), f32)
        v2 = 1.0 + 0.1 * jnp.abs(jax.random.normal(ks[9], (Co,), f32))
        s1 = g1 / jnp.sqrt(v1 + eps)
        s2 = g2 / jnp.sqrt(v2 + eps)
        # raw params (kept for the full-precision pure-JAX reference)
        self.dw, self.pw, self.s1, self.s2 = dw, pw, s1, s2
        self.b1 = (be1 - m1 * s1).reshape(1, C)                     # folded BN1 bias
        self.b2 = (be2 - m2 * s2).reshape(1, Co)                    # folded BN2 bias
        # kernel params: BN scale folded into the conv weights
        self.dwf = dw * s1                                          # (3,3,C)
        pwf = pw * s2                                               # (C,Co)
        assert 128 % C == 0, "lane packing requires C | 128"        # TODO(synk): general C
        self.Wg = 128 // C
        # group block-diagonal pointwise weight: (Wg*C, Wg*Co), bf16 for the MXU
        eye = jnp.eye(self.Wg, dtype=f32)
        self.pw_bd = (eye[:, None, :, None] * pwf[None, :, None, :]
                      ).reshape(self.Wg * C, self.Wg * Co).astype(jnp.bfloat16)
        if self.stride == 2:
            self.w1 = 0.3 * jax.random.normal(ks[10], (C, Ch), f32)   # SE fc1 weight^T
            self.fb1 = 0.1 * jax.random.normal(ks[11], (1, Ch), f32)
            self.w2 = 0.3 * jax.random.normal(ks[12], (Ch, C), f32)   # SE fc2 weight^T
            self.fb2 = 0.1 * jax.random.normal(ks[13], (1, C), f32)
            # sublane-friendly zero-padded copies for the kernel (identical math)
            self.Chp = _round_up(Ch, 8)
            self.w1k = jnp.pad(self.w1, ((0, 0), (0, self.Chp - Ch)))
            self.fb1k = jnp.pad(self.fb1, ((0, 0), (0, self.Chp - Ch)))
            self.w2k = jnp.pad(self.w2, ((0, self.Chp - Ch), (0, 0)))

    # ---- forward (PyTorch NCHW API; layout transposes kept for API parity) ----
    def __call__(self, x_nchw):
        if self.stride == 2:
            out, dec = self._fwd(x_nchw)
            self.add.append(dec)                 # mimic self.add.append(out1)
            return out
        return self._fwd(x_nchw)

    def clean(self):
        while self.add:
            self.add.pop()
        return self.add

    # ---- stride == 1 ----
    def _forward_s1_impl(self, x_nchw):
        x = jnp.transpose(x_nchw, (0, 2, 3, 1)).astype(jnp.float32)   # NCHW -> NHWC
        B, H, W, C = x.shape
        Co, Wg = self.outplanes, self.Wg
        assert W % Wg == 0, "W must be a multiple of 128//C"          # TODO(synk): pad W
        Hp = _round_up(H + 2, 8)
        Wp = _round_up(W + 2, Wg)                                      # Wp*C % 128 == 0
        Wl = Wp * C
        xp = jnp.pad(x, ((0, 0), (1, Hp - H - 1), (1, Wp - W - 1), (0, 0)))
        xp = xp.reshape(B, Hp, Wl).astype(jnp.bfloat16)                # lane-packed, bf16

        dwl = jnp.tile(self.dwf.reshape(9, 1, C), (1, W, 1)).reshape(9, W * C)
        b1l = jnp.tile(self.b1, (1, W))                                # (1, W*C)
        b2l = jnp.tile(self.b2, (1, W))                                # (1, W*Co)

        blk = (Hp * Wl * 2 + 9 * W * C * 4 + W * C * 4
               + (Wg * C) * (Wg * Co) * 2 + W * Co * 4 + H * W * Co * 4)
        kernel = functools.partial(_block_s1_kernel, C=C, Wg=Wg)
        out = pl.pallas_call(
            kernel,
            grid=(B,),
            in_specs=[
                pl.BlockSpec((None, Hp, Wl), lambda b: (b, 0, 0)),
                pl.BlockSpec((9, W * C), lambda b: (0, 0)),
                pl.BlockSpec((1, W * C), lambda b: (0, 0)),
                pl.BlockSpec((Wg * C, Wg * Co), lambda b: (0, 0)),
                pl.BlockSpec((1, W * Co), lambda b: (0, 0)),
            ],
            out_specs=pl.BlockSpec((None, H, W * Co), lambda b: (b, 0, 0)),
            out_shape=jax.ShapeDtypeStruct((B, H, W * Co), jnp.float32),
            compiler_params=pltpu.CompilerParams(
                dimension_semantics=("parallel",),
                vmem_limit_bytes=_vmem_limit_bytes(blk)),
        )(xp, dwl, b1l, self.pw_bd, b2l)
        out = out.reshape(B, H, W, Co)
        return jnp.transpose(out, (0, 3, 1, 2))                        # NHWC -> NCHW

    # ---- stride == 2 (Block + SE/avg-pool decision branch) ----
    def _forward_s2_impl(self, x_nchw):
        x = jnp.transpose(x_nchw, (0, 2, 3, 1)).astype(jnp.float32)
        B, H, W, C = x.shape
        assert H % 2 == 0 and W % 2 == 0
        Co, Chp, Wg = self.outplanes, self.Chp, self.Wg
        Ho, Wo = H // 2, W // 2
        assert Wo % Wg == 0, "W//2 must be a multiple of 128//C"       # TODO(synk): pad Wo
        Hp2, Wp2 = Ho + 1, Wo + 1
        Hp2a = _round_up(Hp2, 8)
        Wp2a = _round_up(Wp2, Wg)
        Wl2 = Wp2a * C

        xpad = jnp.pad(x, ((0, 0), (1, 1), (1, 1), (0, 0)))            # (B, H+2, W+2, C)

        def parity(a, c0):
            p = xpad[:, a::2, c0::2, :]                                # (B, Hp2, Wp2, C)
            p = jnp.pad(p, ((0, 0), (0, Hp2a - Hp2), (0, Wp2a - Wp2), (0, 0)))
            return p.reshape(B, Hp2a, Wl2).astype(jnp.bfloat16)

        x00, x01, x10, x11 = parity(0, 0), parity(0, 1), parity(1, 0), parity(1, 1)

        dwl = jnp.tile(self.dwf.reshape(9, 1, C), (1, Wo, 1)).reshape(9, Wo * C)
        b1l = jnp.tile(self.b1, (1, Wo))                               # (1, Wo*C)
        b2l = jnp.tile(self.b2, (1, Wo))                               # (1, Wo*Co)
        sel = jnp.tile(jnp.eye(C, dtype=jnp.float32), (Wp2a, 1))       # (Wl2, C)

        blk = (4 * Hp2a * Wl2 * 2 + 9 * Wo * C * 4 + Wo * C * 4
               + (Wg * C) * (Wg * Co) * 2 + Wo * Co * 4 + Wl2 * C * 4
               + C * Chp * 4 + Chp * 4 + Chp * C * 4 + C * 4
               + Ho * Wo * Co * 4 + C * 4)
        kernel = functools.partial(_decision_s2_kernel, C=C, Wg=Wg, hw_count=float(H * W))
        out, dec = pl.pallas_call(
            kernel,
            grid=(B,),
            in_specs=[pl.BlockSpec((None, Hp2a, Wl2), lambda b: (b, 0, 0))] * 4 + [
                pl.BlockSpec((9, Wo * C), lambda b: (0, 0)),
                pl.BlockSpec((1, Wo * C), lambda b: (0, 0)),
                pl.BlockSpec((Wg * C, Wg * Co), lambda b: (0, 0)),
                pl.BlockSpec((1, Wo * Co), lambda b: (0, 0)),
                pl.BlockSpec((Wl2, C), lambda b: (0, 0)),
                pl.BlockSpec((C, Chp), lambda b: (0, 0)),
                pl.BlockSpec((1, Chp), lambda b: (0, 0)),
                pl.BlockSpec((Chp, C), lambda b: (0, 0)),
                pl.BlockSpec((1, C), lambda b: (0, 0)),
            ],
            out_specs=[pl.BlockSpec((None, Ho, Wo * Co), lambda b: (b, 0, 0)),
                       pl.BlockSpec((None, 1, C), lambda b: (b, 0, 0))],
            out_shape=(jax.ShapeDtypeStruct((B, Ho, Wo * Co), jnp.float32),
                       jax.ShapeDtypeStruct((B, 1, C), jnp.float32)),
            compiler_params=pltpu.CompilerParams(
                dimension_semantics=("parallel",),
                vmem_limit_bytes=_vmem_limit_bytes(blk)),
        )(x00, x01, x10, x11, dwl, b1l, self.pw_bd, b2l, sel,
          self.w1k, self.fb1k, self.w2k, self.fb2)

        out = jnp.transpose(out.reshape(B, Ho, Wo, Co), (0, 3, 1, 2))  # NHWC -> NCHW
        dec = dec.reshape(B, C, 1, 1)
        return out, dec

    # ---- pure-JAX full-precision reference for validation ----
    def _reference(self, x_nchw):
        x = jnp.transpose(x_nchw, (0, 2, 3, 1)).astype(jnp.float32)
        C = self.inplanes
        dww = self.dw.reshape(3, 3, 1, C)
        y = jax.lax.conv_general_dilated(
            x, dww, (self.stride, self.stride), ((1, 1), (1, 1)),
            dimension_numbers=("NHWC", "HWIO", "NHWC"),
            feature_group_count=C, precision=jax.lax.Precision.HIGHEST)
        y = jnp.clip(y * self.s1 + self.b1[0], 0.0, 6.0)
        y = jnp.einsum("bhwc,cd->bhwd", y, self.pw, precision=jax.lax.Precision.HIGHEST)
        y = jnp.clip(y * self.s2 + self.b2[0], 0.0, 6.0)
        out = jnp.transpose(y, (0, 3, 1, 2))
        if self.stride != 2:
            return out, None
        xm = jnp.mean(x, axis=(1, 2))                                  # (B, C)
        z = jnp.maximum(xm @ self.w1 + self.fb1[0], 0.0)
        g = jax.nn.sigmoid(z @ self.w2 + self.fb2[0])
        dec = (xm * g).reshape(x.shape[0], C, 1, 1)
        return out, dec


# ---------------------------------------------------------------------------
# main
# ---------------------------------------------------------------------------

if __name__ == "__main__":
    key = jax.random.PRNGKey(0)
    kx, kp2, kp1 = jax.random.split(key, 3)

    # batch=2, inplanes=32 (SE reduction 16 -> hidden 2), outplanes=64, spatial 16x16, NCHW.
    x = jax.random.normal(kx, (2, 32, 16, 16), jnp.float32)

    # stride == 2 path: Block(stride=2) + SELayer/avg-pool decision branch
    mod2 = DecisionPallas(32, 64, stride=2, key=kp2)
    out2 = mod2(x)
    jax.block_until_ready(out2)
    dec2 = mod2.add[-1]
    jax.block_until_ready(dec2)
    ref_out2, ref_dec2 = mod2._reference(x)
    assert out2.shape == (2, 64, 8, 8) and dec2.shape == (2, 32, 1, 1)
    assert jnp.allclose(out2, ref_out2, atol=3e-2, rtol=3e-2), \
        float(jnp.max(jnp.abs(out2 - ref_out2)))
    assert jnp.allclose(dec2, ref_dec2, atol=3e-2, rtol=3e-2), \
        float(jnp.max(jnp.abs(dec2 - ref_dec2)))
    mod2.clean()

    # stride == 1 path: Block(stride=1) only
    mod1 = DecisionPallas(32, 64, stride=1, key=kp1)
    out1 = mod1(x)
    jax.block_until_ready(out1)
    ref_out1, _ = mod1._reference(x)
    assert out1.shape == (2, 64, 16, 16)
    assert jnp.allclose(out1, ref_out1, atol=3e-2, rtol=3e-2), \
        float(jnp.max(jnp.abs(out1 - ref_out1)))

    print("KERNEL_OK")
</pallas_src>

<mosaic_0001>
module attributes {stable_mosaic.version = 11 : i64} {
  func.func @_decision_s2_kernel(%arg0: i32, %arg1: memref<1x16x384xbf16, #tpu.memory_space<vmem>>, %arg2: memref<1x16x384xbf16, #tpu.memory_space<vmem>>, %arg3: memref<1x16x384xbf16, #tpu.memory_space<vmem>>, %arg4: memref<1x16x384xbf16, #tpu.memory_space<vmem>>, %arg5: memref<9x256xf32, #tpu.memory_space<vmem>>, %arg6: memref<1x256xf32, #tpu.memory_space<vmem>>, %arg7: memref<128x256xbf16, #tpu.memory_space<vmem>>, %arg8: memref<1x512xf32, #tpu.memory_space<vmem>>, %arg9: memref<384x32xf32, #tpu.memory_space<vmem>>, %arg10: memref<32x8xf32, #tpu.memory_space<vmem>>, %arg11: memref<1x8xf32, #tpu.memory_space<vmem>>, %arg12: memref<8x32xf32, #tpu.memory_space<vmem>>, %arg13: memref<1x32xf32, #tpu.memory_space<vmem>>, %arg14: memref<1x8x512xf32, #tpu.memory_space<vmem>>, %arg15: memref<1x1x32xf32, #tpu.memory_space<vmem>>) attributes {dimension_semantics = [#tpu.dimension_semantics<parallel>], iteration_bounds = array<i64: 2>, scalar_prefetch = 0 : i64, scratch_operands = 0 : i64, tpu.core_type = #tpu.core_type<tc>, window_params = [{transform_indices = @transform_0, window_bounds = array<i64: 1, 16, 384>}, {transform_indices = @transform_1, window_bounds = array<i64: 1, 16, 384>}, {transform_indices = @transform_2, window_bounds = array<i64: 1, 16, 384>}, {transform_indices = @transform_3, window_bounds = array<i64: 1, 16, 384>}, {pipeline_mode = #tpu.pipeline_mode<synchronous>, transform_indices = @transform_4, window_bounds = array<i64: 9, 256>}, {pipeline_mode = #tpu.pipeline_mode<synchronous>, transform_indices = @transform_5, window_bounds = array<i64: 1, 256>}, {pipeline_mode = #tpu.pipeline_mode<synchronous>, transform_indices = @transform_6, window_bounds = array<i64: 128, 256>}, {pipeline_mode = #tpu.pipeline_mode<synchronous>, transform_indices = @transform_7, window_bounds = array<i64: 1, 512>}, {pipeline_mode = #tpu.pipeline_mode<synchronous>, transform_indices = @transform_8, window_bounds = array<i64: 384, 32>}, {pipeline_mode = #tpu.pipeline_mode<synchronous>, transform_indices = @transform_9, window_bounds = array<i64: 32, 8>}, {pipeline_mode = #tpu.pipeline_mode<synchronous>, transform_indices = @transform_10, window_bounds = array<i64: 1, 8>}, {pipeline_mode = #tpu.pipeline_mode<synchronous>, transform_indices = @transform_11, window_bounds = array<i64: 8, 32>}, {pipeline_mode = #tpu.pipeline_mode<synchronous>, transform_indices = @transform_12, window_bounds = array<i64: 1, 32>}, {transform_indices = @transform_13, window_bounds = array<i64: 1, 8, 512>}, {transform_indices = @transform_14, window_bounds = array<i64: 1, 1, 32>}]} {
    %c0 = arith.constant 0 : index
    %c0_0 = arith.constant 0 : index
    %c0_1 = arith.constant 0 : index
    %0 = vector.load %arg1[%c0, %c0_0, %c0_1] : memref<1x16x384xbf16, #tpu.memory_space<vmem>>, vector<1x16x384xbf16>
    %1 = vector.shape_cast %0 : vector<1x16x384xbf16> to vector<16x384xbf16>
    %2 = arith.extf %1 : vector<16x384xbf16> to vector<16x384xf32>
    %c0_2 = arith.constant 0 : index
    %c0_3 = arith.constant 0 : index
    %c0_4 = arith.constant 0 : index
    %3 = vector.load %arg2[%c0_2, %c0_3, %c0_4] : memref<1x16x384xbf16, #tpu.memory_space<vmem>>, vector<1x16x384xbf16>
    %4 = vector.shape_cast %3 : vector<1x16x384xbf16> to vector<16x384xbf16>
    %5 = arith.extf %4 : vector<16x384xbf16> to vector<16x384xf32>
    %c0_5 = arith.constant 0 : index
    %c0_6 = arith.constant 0 : index
    %c0_7 = arith.constant 0 : index
    %6 = vector.load %arg3[%c0_5, %c0_6, %c0_7] : memref<1x16x384xbf16, #tpu.memory_space<vmem>>, vector<1x16x384xbf16>
    %7 = vector.shape_cast %6 : vector<1x16x384xbf16> to vector<16x384xbf16>
    %8 = arith.extf %7 : vector<16x384xbf16> to vector<16x384xf32>
    %c0_8 = arith.constant 0 : index
    %c0_9 = arith.constant 0 : index
    %c0_10 = arith.constant 0 : index
    %9 = vector.load %arg4[%c0_8, %c0_9, %c0_10] : memref<1x16x384xbf16, #tpu.memory_space<vmem>>, vector<1x16x384xbf16>
    %10 = vector.shape_cast %9 : vector<1x16x384xbf16> to vector<16x384xbf16>
    %11 = arith.extf %10 : vector<16x384xbf16> to vector<16x384xf32>
    %c0_11 = arith.constant 0 : index
    %c0_12 = arith.constant 0 : index
    %12 = vector.load %arg5[%c0_11, %c0_12] : memref<9x256xf32, #tpu.memory_space<vmem>>, vector<9x256xf32>
    %13 = vector.extract_strided_slice %2 {offsets = [0, 0], sizes = [8, 256], strides = [1, 1]} : vector<16x384xf32> to vector<8x256xf32>
    %14 = vector.extract_strided_slice %12 {offsets = [0, 0], sizes = [1, 256], strides = [1, 1]} : vector<9x256xf32> to vector<1x256xf32>
    %15 = vector.broadcast %14 : vector<1x256xf32> to vector<8x256xf32>
    %16 = arith.mulf %13, %15 : vector<8x256xf32>
    %c0_13 = arith.constant 0 : index
    %c0_14 = arith.constant 0 : index
    %17 = vector.load %arg6[%c0_13, %c0_14] : memref<1x256xf32, #tpu.memory_space<vmem>>, vector<1x256xf32>
    %18 = vector.broadcast %17 : vector<1x256xf32> to vector<8x256xf32>
    %19 = arith.addf %18, %16 : vector<8x256xf32>
    %20 = vector.extract_strided_slice %5 {offsets = [0, 0], sizes = [8, 256], strides = [1, 1]} : vector<16x384xf32> to vector<8x256xf32>
    %21 = vector.extract_strided_slice %12 {offsets = [1, 0], sizes = [1, 256], strides = [1, 1]} : vector<9x256xf32> to vector<1x256xf32>
    %22 = vector.broadcast %21 : vector<1x256xf32> to vector<8x256xf32>
    %23 = arith.mulf %20, %22 : vector<8x256xf32>
    %24 = arith.addf %19, %23 : vector<8x256xf32>
    %c352_i32 = arith.constant 352 : i32
    %25 = tpu.dynamic_rotate %2 by %c352_i32 dim 1 : vector<16x384xf32>, i32 -> vector<16x384xf32>
    %26 = vector.extract_strided_slice %25 {offsets = [0, 0], sizes = [8, 256], strides = [1, 1]} : vector<16x384xf32> to vector<8x256xf32>
    %27 = vector.extract_strided_slice %12 {offsets = [2, 0], sizes = [1, 256], strides = [1, 1]} : vector<9x256xf32> to vector<1x256xf32>
    %28 = vector.broadcast %27 : vector<1x256xf32> to vector<8x256xf32>
    %29 = arith.mulf %26, %28 : vector<8x256xf32>
    %30 = arith.addf %24, %29 : vector<8x256xf32>
    %31 = vector.extract_strided_slice %8 {offsets = [0, 0], sizes = [8, 256], strides = [1, 1]} : vector<16x384xf32> to vector<8x256xf32>
    %32 = vector.extract_strided_slice %12 {offsets = [3, 0], sizes = [1, 256], strides = [1, 1]} : vector<9x256xf32> to vector<1x256xf32>
    %33 = vector.broadcast %32 : vector<1x256xf32> to vector<8x256xf32>
    %34 = arith.mulf %31, %33 : vector<8x256xf32>
    %35 = arith.addf %30, %34 : vector<8x256xf32>
    %36 = vector.extract_strided_slice %11 {offsets = [0, 0], sizes = [8, 256], strides = [1, 1]} : vector<16x384xf32> to vector<8x256xf32>
    %37 = vector.extract_strided_slice %12 {offsets = [4, 0], sizes = [1, 256], strides = [1, 1]} : vector<9x256xf32> to vector<1x256xf32>
    %38 = vector.broadcast %37 : vector<1x256xf32> to vector<8x256xf32>
    %39 = arith.mulf %36, %38 : vector<8x256xf32>
    %40 = arith.addf %35, %39 : vector<8x256xf32>
    %c352_i32_15 = arith.constant 352 : i32
    %41 = tpu.dynamic_rotate %8 by %c352_i32_15 dim 1 : vector<16x384xf32>, i32 -> vector<16x384xf32>
    %42 = vector.extract_strided_slice %41 {offsets = [0, 0], sizes = [8, 256], strides = [1, 1]} : vector<16x384xf32> to vector<8x256xf32>
    %43 = vector.extract_strided_slice %12 {offsets = [5, 0], sizes = [1, 256], strides = [1, 1]} : vector<9x256xf32> to vector<1x256xf32>
    %44 = vector.broadcast %43 : vector<1x256xf32> to vector<8x256xf32>
    %45 = arith.mulf %42, %44 : vector<8x256xf32>
    %46 = arith.addf %40, %45 : vector<8x256xf32>
    %c15_i32 = arith.constant 15 : i32
    %47 = tpu.dynamic_rotate %2 by %c15_i32 dim 0 : vector<16x384xf32>, i32 -> vector<16x384xf32>
    %48 = vector.extract_strided_slice %47 {offsets = [0, 0], sizes = [8, 256], strides = [1, 1]} : vector<16x384xf32> to vector<8x256xf32>
    %49 = vector.extract_strided_slice %12 {offsets = [6, 0], sizes = [1, 256], strides = [1, 1]} : vector<9x256xf32> to vector<1x256xf32>
    %50 = vector.broadcast %49 : vector<1x256xf32> to vector<8x256xf32>
    %51 = arith.mulf %48, %50 : vector<8x256xf32>
    %52 = arith.addf %46, %51 : vector<8x256xf32>
    %c15_i32_16 = arith.constant 15 : i32
    %53 = tpu.dynamic_rotate %5 by %c15_i32_16 dim 0 : vector<16x384xf32>, i32 -> vector<16x384xf32>
    %54 = vector.extract_strided_slice %53 {offsets = [0, 0], sizes = [8, 256], strides = [1, 1]} : vector<16x384xf32> to vector<8x256xf32>
    %55 = vector.extract_strided_slice %12 {offsets = [7, 0], sizes = [1, 256], strides = [1, 1]} : vector<9x256xf32> to vector<1x256xf32>
    %56 = vector.broadcast %55 : vector<1x256xf32> to vector<8x256xf32>
    %57 = arith.mulf %54, %56 : vector<8x256xf32>
    %58 = arith.addf %52, %57 : vector<8x256xf32>
    %c15_i32_17 = arith.constant 15 : i32
    %59 = tpu.dynamic_rotate %2 by %c15_i32_17 dim 0 : vector<16x384xf32>, i32 -> vector<16x384xf32>
    %c352_i32_18 = arith.constant 352 : i32
    %60 = tpu.dynamic_rotate %59 by %c352_i32_18 dim 1 : vector<16x384xf32>, i32 -> vector<16x384xf32>
    %61 = vector.extract_strided_slice %60 {offsets = [0, 0], sizes = [8, 256], strides = [1, 1]} : vector<16x384xf32> to vector<8x256xf32>
    %62 = vector.extract_strided_slice %12 {offsets = [8, 0], sizes = [1, 256], strides = [1, 1]} : vector<9x256xf32> to vector<1x256xf32>
    %63 = vector.broadcast %62 : vector<1x256xf32> to vector<8x256xf32>
    %64 = arith.mulf %61, %63 : vector<8x256xf32>
    %65 = arith.addf %58, %64 : vector<8x256xf32>
    %cst = arith.constant 0.000000e+00 : f32
    %cst_19 = arith.constant 6.000000e+00 : f32
    %66 = vector.broadcast %cst : f32 to vector<8x256xf32>
    %67 = arith.maximumf %66, %65 : vector<8x256xf32>
    %68 = vector.broadcast %cst_19 : f32 to vector<8x256xf32>
    %69 = arith.minimumf %68, %67 : vector<8x256xf32>
    %70 = arith.truncf %69 : vector<8x256xf32> to vector<8x256xbf16>
    %c0_20 = arith.constant 0 : index
    %c0_21 = arith.constant 0 : index
    %71 = vector.load %arg7[%c0_20, %c0_21] : memref<128x256xbf16, #tpu.memory_space<vmem>>, vector<128x256xbf16>
    %72 = vector.extract_strided_slice %70 {offsets = [0, 0], sizes = [8, 128], strides = [1, 1]} : vector<8x256xbf16> to vector<8x128xbf16>
    %cst_22 = arith.constant dense<0.000000e+00> : vector<8x256xf32>
    %73 = tpu.matmul %72, %71, %cst_22 {dimension_numbers = #tpu.dot_dimension_numbers<[1], [0], [0], [1], [0, 0, 1, 1], [], []>} : vector<8x128xbf16>, vector<128x256xbf16>, vector<8x256xf32> -> vector<8x256xf32>
    %74 = vector.extract_strided_slice %70 {offsets = [0, 128], sizes = [8, 128], strides = [1, 1]} : vector<8x256xbf16> to vector<8x128xbf16>
    %cst_23 = arith.constant dense<0.000000e+00> : vector<8x256xf32>
    %75 = tpu.matmul %74, %71, %cst_23 {dimension_numbers = #tpu.dot_dimension_numbers<[1], [0], [0], [1], [0, 0, 1, 1], [], []>} : vector<8x128xbf16>, vector<128x256xbf16>, vector<8x256xf32> -> vector<8x256xf32>
    %76 = tpu.concatenate %73, %75 in 1 : vector<8x256xf32>, vector<8x256xf32> -> vector<8x512xf32>
    %c0_24 = arith.constant 0 : index
    %c0_25 = arith.constant 0 : index
    %77 = vector.load %arg8[%c0_24, %c0_25] : memref<1x512xf32, #tpu.memory_space<vmem>>, vector<1x512xf32>
    %78 = vector.broadcast %77 : vector<1x512xf32> to vector<8x512xf32>
    %79 = arith.addf %76, %78 : vector<8x512xf32>
    %cst_26 = arith.constant 0.000000e+00 : f32
    %cst_27 = arith.constant 6.000000e+00 : f32
    %80 = vector.broadcast %cst_26 : f32 to vector<8x512xf32>
    %81 = arith.maximumf %80, %79 : vector<8x512xf32>
    %82 = vector.broadcast %cst_27 : f32 to vector<8x512xf32>
    %83 = arith.minimumf %82, %81 : vector<8x512xf32>
    %c0_28 = arith.constant 0 : index
    %c0_29 = arith.constant 0 : index
    %c0_30 = arith.constant 0 : index
    %84 = vector.load %arg14[%c0_28, %c0_29, %c0_30] : memref<1x8x512xf32, #tpu.memory_space<vmem>>, vector<1x8x512xf32>
    %85 = vector.shape_cast %84 : vector<1x8x512xf32> to vector<8x512xf32>
    %86 = vector.shape_cast %83 : vector<8x512xf32> to vector<1x8x512xf32>
    tpu.vector_store %arg14[%c0_28, %c0_29, %c0_30], %86 {strides = array<i32>} : memref<1x8x512xf32, #tpu.memory_space<vmem>>, vector<1x8x512xf32>,
    %cst_31 = arith.constant dense<0.000000e+00> : vector<384xf32>
    %87 = vector.multi_reduction <add>, %2, %cst_31 [0] : vector<16x384xf32> to vector<384xf32>
    %88 = vector.shape_cast %87 : vector<384xf32> to vector<1x384xf32>
    %cst_32 = arith.constant dense<0.000000e+00> : vector<384xf32>
    %89 = vector.multi_reduction <add>, %5, %cst_32 [0] : vector<16x384xf32> to vector<384xf32>
    %90 = vector.shape_cast %89 : vector<384xf32> to vector<1x384xf32>
    %91 = arith.addf %88, %90 : vector<1x384xf32>
    %cst_33 = arith.constant dense<0.000000e+00> : vector<384xf32>
    %92 = vector.multi_reduction <add>, %8, %cst_33 [0] : vector<16x384xf32> to vector<384xf32>
    %93 = vector.shape_cast %92 : vector<384xf32> to vector<1x384xf32>
    %94 = arith.addf %91, %93 : vector<1x384xf32>
    %cst_34 = arith.constant dense<0.000000e+00> : vector<384xf32>
    %95 = vector.multi_reduction <add>, %11, %cst_34 [0] : vector<16x384xf32> to vector<384xf32>
    %96 = vector.shape_cast %95 : vector<384xf32> to vector<1x384xf32>
    %97 = arith.addf %94, %96 : vector<1x384xf32>
    %c0_35 = arith.constant 0 : index
    %c0_36 = arith.constant 0 : index
    %98 = vector.load %arg9[%c0_35, %c0_36] : memref<384x32xf32, #tpu.memory_space<vmem>>, vector<384x32xf32>
    %cst_37 = arith.constant dense<0.000000e+00> : vector<1x32xf32>
    %99 = tpu.matmul %97, %98, %cst_37 {dimension_numbers = #tpu.dot_dimension_numbers<[1], [0], [0], [1], [0, 0, 1, 1], [], []>} : vector<1x384xf32>, vector<384x32xf32>, vector<1x32xf32> -> vector<1x32xf32>
    %cst_38 = arith.constant 3.906250e-03 : f32
    %100 = vector.broadcast %cst_38 : f32 to vector<1x32xf32>
    %101 = arith.mulf %99, %100 : vector<1x32xf32>
    %c0_39 = arith.constant 0 : index
    %c0_40 = arith.constant 0 : index
    %102 = vector.load %arg10[%c0_39, %c0_40] : memref<32x8xf32, #tpu.memory_space<vmem>>, vector<32x8xf32>
    %cst_41 = arith.constant dense<0.000000e+00> : vector<1x8xf32>
    %103 = tpu.matmul %101, %102, %cst_41 {dimension_numbers = #tpu.dot_dimension_numbers<[1], [0], [0], [1], [0, 0, 1, 1], [], []>} : vector<1x32xf32>, vector<32x8xf32>, vector<1x8xf32> -> vector<1x8xf32>
    %c0_42 = arith.constant 0 : index
    %c0_43 = arith.constant 0 : index
    %104 = vector.load %arg11[%c0_42, %c0_43] : memref<1x8xf32, #tpu.memory_space<vmem>>, vector<1x8xf32>
    %105 = arith.addf %103, %104 : vector<1x8xf32>
    %cst_44 = arith.constant 0.000000e+00 : f32
    %106 = vector.broadcast %cst_44 : f32 to vector<1x8xf32>
    %107 = arith.maximumf %105, %106 : vector<1x8xf32>
    %c0_45 = arith.constant 0 : index
    %c0_46 = arith.constant 0 : index
    %108 = vector.load %arg12[%c0_45, %c0_46] : memref<8x32xf32, #tpu.memory_space<vmem>>, vector<8x32xf32>
    %cst_47 = arith.constant dense<0.000000e+00> : vector<1x32xf32>
    %109 = tpu.matmul %107, %108, %cst_47 {dimension_numbers = #tpu.dot_dimension_numbers<[1], [0], [0], [1], [0, 0, 1, 1], [], []>} : vector<1x8xf32>, vector<8x32xf32>, vector<1x32xf32> -> vector<1x32xf32>
    %c0_48 = arith.constant 0 : index
    %c0_49 = arith.constant 0 : index
    %110 = vector.load %arg13[%c0_48, %c0_49] : memref<1x32xf32, #tpu.memory_space<vmem>>, vector<1x32xf32>
    %111 = arith.addf %109, %110 : vector<1x32xf32>
    %112 = arith.negf %111 : vector<1x32xf32>
    %113 = math.exp %112 : vector<1x32xf32>
    %cst_50 = arith.constant 1.000000e+00 : f32
    %114 = vector.broadcast %cst_50 : f32 to vector<1x32xf32>
    %115 = arith.addf %114, %113 : vector<1x32xf32>
    %116 = arith.divf %114, %115 : vector<1x32xf32>
    %117 = arith.mulf %101, %116 : vector<1x32xf32>
    %c0_51 = arith.constant 0 : index
    %c0_52 = arith.constant 0 : index
    %c0_53 = arith.constant 0 : index
    %118 = vector.load %arg15[%c0_51, %c0_52, %c0_53] : memref<1x1x32xf32, #tpu.memory_space<vmem>>, vector<1x1x32xf32>
    %119 = vector.shape_cast %118 : vector<1x1x32xf32> to vector<1x32xf32>
    %120 = vector.shape_cast %117 : vector<1x32xf32> to vector<1x1x32xf32>
    tpu.vector_store %arg15[%c0_51, %c0_52, %c0_53], %120 {strides = array<i32>} : memref<1x1x32xf32, #tpu.memory_space<vmem>>, vector<1x1x32xf32>,
    return
  }
  func.func @transform_0(%arg0: i32) -> (i32, i32, i32) {
    %c0_i32 = arith.constant 0 : i32
    %c0_i32_0 = arith.constant 0 : i32
    %c0_i32_1 = arith.constant 0 : i32
    return %arg0, %c0_i32, %c0_i32_0 : i32, i32, i32
  }
  func.func @transform_1(%arg0: i32) -> (i32, i32, i32) {
    %c0_i32 = arith.constant 0 : i32
    %c0_i32_0 = arith.constant 0 : i32
    %c0_i32_1 = arith.constant 0 : i32
    return %arg0, %c0_i32, %c0_i32_0 : i32, i32, i32
  }
  func.func @transform_2(%arg0: i32) -> (i32, i32, i32) {
    %c0_i32 = arith.constant 0 : i32
    %c0_i32_0 = arith.constant 0 : i32
    %c0_i32_1 = arith.constant 0 : i32
    return %arg0, %c0_i32, %c0_i32_0 : i32, i32, i32
  }
  func.func @transform_3(%arg0: i32) -> (i32, i32, i32) {
    %c0_i32 = arith.constant 0 : i32
    %c0_i32_0 = arith.constant 0 : i32
    %c0_i32_1 = arith.constant 0 : i32
    return %arg0, %c0_i32, %c0_i32_0 : i32, i32, i32
  }
  func.func @transform_4(%arg0: i32) -> (i32, i32) {
    %c0_i32 = arith.constant 0 : i32
    %c0_i32_0 = arith.constant 0 : i32
    %c0_i32_1 = arith.constant 0 : i32
    return %c0_i32, %c0_i32_0 : i32, i32
  }
  func.func @transform_5(%arg0: i32) -> (i32, i32) {
    %c0_i32 = arith.constant 0 : i32
    %c0_i32_0 = arith.constant 0 : i32
    %c0_i32_1 = arith.constant 0 : i32
    return %c0_i32, %c0_i32_0 : i32, i32
  }
  func.func @transform_6(%arg0: i32) -> (i32, i32) {
    %c0_i32 = arith.constant 0 : i32
    %c0_i32_0 = arith.constant 0 : i32
    %c0_i32_1 = arith.constant 0 : i32
    return %c0_i32, %c0_i32_0 : i32, i32
  }
  func.func @transform_7(%arg0: i32) -> (i32, i32) {
    %c0_i32 = arith.constant 0 : i32
    %c0_i32_0 = arith.constant 0 : i32
    %c0_i32_1 = arith.constant 0 : i32
    return %c0_i32, %c0_i32_0 : i32, i32
  }
  func.func @transform_8(%arg0: i32) -> (i32, i32) {
    %c0_i32 = arith.constant 0 : i32
    %c0_i32_0 = arith.constant 0 : i32
    %c0_i32_1 = arith.constant 0 : i32
    return %c0_i32, %c0_i32_0 : i32, i32
  }
  func.func @transform_9(%arg0: i32) -> (i32, i32) {
    %c0_i32 = arith.constant 0 : i32
    %c0_i32_0 = arith.constant 0 : i32
    %c0_i32_1 = arith.constant 0 : i32
    return %c0_i32, %c0_i32_0 : i32, i32
  }
  func.func @transform_10(%arg0: i32) -> (i32, i32) {
    %c0_i32 = arith.constant 0 : i32
    %c0_i32_0 = arith.constant 0 : i32
    %c0_i32_1 = arith.constant 0 : i32
    return %c0_i32, %c0_i32_0 : i32, i32
  }
  func.func @transform_11(%arg0: i32) -> (i32, i32) {
    %c0_i32 = arith.constant 0 : i32
    %c0_i32_0 = arith.constant 0 : i32
    %c0_i32_1 = arith.constant 0 : i32
    return %c0_i32, %c0_i32_0 : i32, i32
  }
  func.func @transform_12(%arg0: i32) -> (i32, i32) {
    %c0_i32 = arith.constant 0 : i32
    %c0_i32_0 = arith.constant 0 : i32
    %c0_i32_1 = arith.constant 0 : i32
    return %c0_i32, %c0_i32_0 : i32, i32
  }
  func.func @transform_13(%arg0: i32) -> (i32, i32, i32) {
    %c0_i32 = arith.constant 0 : i32
    %c0_i32_0 = arith.constant 0 : i32
    %c0_i32_1 = arith.constant 0 : i32
    return %arg0, %c0_i32, %c0_i32_0 : i32, i32, i32
  }
  func.func @transform_14(%arg0: i32) -> (i32, i32, i32) {
    %c0_i32 = arith.constant 0 : i32
    %c0_i32_0 = arith.constant 0 : i32
    %c0_i32_1 = arith.constant 0 : i32
    return %arg0, %c0_i32, %c0_i32_0 : i32, i32, i32
  }
}

</mosaic_0001>

<llo_original>
// kernel: tile.20
$region0: #{tile.20}
  %s0 = inlined_call_operand.vmem [shape: f32[9,8,1,1,32], index: 0, kind: input, shape index: {}]
  %s1 = inlined_call_operand.vmem [shape: f32[9,256], index: 1, kind: output, shape index: {}]
  %v2 = vld [vmem:[%s0] ss:$4 sm:$0xff]
  %vm3 = vcmask 261120
  %4 = vst.msk [vmem:[%s1] ss:$8 sm:$0x3] %vm3, %v2
  %s5 = scalar_lea.vmem %s1, 4294967281
  %6 = vst.msk [vmem:[%s5] ss:$8 sm:$0xc] %vm3, %v2
  %s7 = scalar_lea.vmem %s1, 4294967266
  %8 = vst.msk [vmem:[%s7] ss:$8 sm:$0x30] %vm3, %v2
  %s9 = scalar_lea.vmem %s1, 4294967251
  %10 = vst.msk [vmem:[%s9] ss:$8 sm:$0xc0] %vm3, %v2
  %s11 = scalar_lea.vmem %s0, 32
  %v12 = vld [vmem:[%s11] ss:$4 sm:$0xff]
  %vm13 = vcmask 261120
  %s14 = scalar_lea.vmem %s1, 4
  %15 = vst.msk [vmem:[%s14] ss:$8 sm:$0x3] %vm13, %v12
  %s16 = scalar_lea.vmem %s1, 4294967285
  %17 = vst.msk [vmem:[%s16] ss:$8 sm:$0xc] %vm13, %v12
  %s18 = scalar_lea.vmem %s1, 4294967270
  %19 = vst.msk [vmem:[%s18] ss:$8 sm:$0x30] %vm13, %v12
  %s20 = scalar_lea.vmem %s1, 4294967255
  %21 = vst.msk [vmem:[%s20] ss:$8 sm:$0xc0] %vm13, %v12
  %s22 = scalar_lea.vmem %s0, 64
  %s23 = smov 3
  %v24 = vld [vmem:[%s22] ss:$4 sm:%s23]
  %vm25 = vcmask 261120
  %s26 = scalar_lea.vmem %s1, 16
  %27 = vst.msk [vmem:[%s26] ss:$8 sm:$0x3] %vm25, %v24
  %s28 = scalar_lea.vmem %s0, 3
  %v29 = vld [vmem:[%s28] ss:$8 sm:$0xf]
  %s30 = scalar_lea.vmem %s0, 3
  %v31 = vld [vmem:[%s30] ss:$8 sm:$0xf0]
  %vm32 = vcmask 1047556
  %v33 = vsel %vm32, %v31, %v29
  %34 = vrot.lane.b32.xlu0 %v33, 96
  %v35 = vpop.permute.xlu0 %34
  %vm36 = vcmask 1048320
  %37 = vst.msk [vmem:[%s1] sm:$0xff] %vm36, %v35
  %s38 = scalar_lea.vmem %s0, 7
  %v39 = vld [vmem:[%s38] ss:$8 sm:$0xf]
  %s40 = scalar_lea.vmem %s0, 7
  %v41 = vld [vmem:[%s40] ss:$8 sm:$0xf0]
  %vm42 = vcmask 1047556
  %v43 = vsel %vm42, %v41, %v39
  %44 = vrot.lane.b32.xlu0 %v43, 96
  %v45 = vpop.permute.xlu0 %44
  %vm46 = vcmask 1048320
  %s47 = scalar_lea.vmem %s1, 8
  %48 = vst.msk [vmem:[%s47] sm:$0xff] %vm46, %v45
  %s49 = scalar_lea.vmem %s0, 67
  %s50 = smov 3
  %v51 = vld [vmem:[%s49] ss:$4 sm:%s50]
  %52 = vrot.lane.b32.xlu0 %v51, 96
  %v53 = vpop.permute.xlu0 %52
  %vm54 = vcmask 1048320
  %s55 = scalar_lea.vmem %s1, 16
  %56 = vst.msk [vmem:[%s55] ss:$8 sm:$0x3] %vm54, %v53
  %s57 = scalar_lea.vmem %s0, 2
  %v58 = vld [vmem:[%s57] ss:$8 sm:$0xf]
  %s59 = scalar_lea.vmem %s0, 2
  %v60 = vld [vmem:[%s59] ss:$8 sm:$0xf0]
  %vm61 = vcmask 1047556
  %v62 = vsel %vm61, %v60, %v58
  %63 = vrot.lane.b32.xlu0 %v62, 64
  %v64 = vpop.permute.xlu0 %63
  %vm65 = vcmask 785920
  %66 = vst.msk [vmem:[%s1] sm:$0xff] %vm65, %v64
  %s67 = scalar_lea.vmem %s0, 6
  %v68 = vld [vmem:[%s67] ss:$8 sm:$0xf]
  %s69 = scalar_lea.vmem %s0, 6
  %v70 = vld [vmem:[%s69] ss:$8 sm:$0xf0]
  %vm71 = vcmask 1047556
  %v72 = vsel %vm71, %v70, %v68
  %73 = vrot.lane.b32.xlu0 %v72, 64
  %v74 = vpop.permute.xlu0 %73
  %vm75 = vcmask 785920
  %s76 = scalar_lea.vmem %s1, 8
  %77 = vst.msk [vmem:[%s76] sm:$0xff] %vm75, %v74
  %s78 = scalar_lea.vmem %s0, 66
  %s79 = smov 3
  %v80 = vld [vmem:[%s78] ss:$4 sm:%s79]
  %81 = vrot.lane.b32.xlu0 %v80, 64
  %v82 = vpop.permute.xlu0 %81
  %vm83 = vcmask 785920
  %s84 = scalar_lea.vmem %s1, 16
  %85 = vst.msk [vmem:[%s84] ss:$8 sm:$0x3] %vm83, %v82
  %s86 = scalar_lea.vmem %s0, 1
  %v87 = vld [vmem:[%s86] ss:$8 sm:$0xf]
  %s88 = scalar_lea.vmem %s0, 1
  %v89 = vld [vmem:[%s88] ss:$8 sm:$0xf0]
  %vm90 = vcmask 1047556
  %v91 = vsel %vm90, %v89, %v87
  %92 = vrot.lane.b32.xlu0 %v91, 32
  %v93 = vpop.permute.xlu0 %92
  %vm94 = vcmask 523520
  %95 = vst.msk [vmem:[%s1] sm:$0xff] %vm94, %v93
  %s96 = scalar_lea.vmem %s0, 5
  %v97 = vld [vmem:[%s96] ss:$8 sm:$0xf]
  %s98 = scalar_lea.vmem %s0, 5
  %v99 = vld [vmem:[%s98] ss:$8 sm:$0xf0]
  %vm100 = vcmask 1047556
  %v101 = vsel %vm100, %v99, %v97
  %102 = vrot.lane.b32.xlu0 %v101, 32
  %v103 = vpop.permute.xlu0 %102
  %vm104 = vcmask 523520
  %s105 = scalar_lea.vmem %s1, 8
  %106 = vst.msk [vmem:[%s105] sm:$0xff] %vm104, %v103
  %s107 = scalar_lea.vmem %s0, 65
  %s108 = smov 3
  %v109 = vld [vmem:[%s107] ss:$4 sm:%s108]
  %110 = vrot.lane.b32.xlu0 %v109, 32
  %v111 = vpop.permute.xlu0 %110
  %vm112 = vcmask 523520
  %s113 = scalar_lea.vmem %s1, 16
  %114 = vst.msk [vmem:[%s113] ss:$8 sm:$0x3] %vm112, %v111

// kernel: _forward_s2_impl.1
$region0: #{_forward_s2_impl.1}
  #allocation0 [shape = 'u32[]', space=smem, size = 0x4, offset = 0x4, fixed_abs, tag = 'smem constant byte address 0x4 - core index']
  #allocation1 [shape = 'u32[144,128]{1,0:T(1,128)}', space=vmem, size = 0x12000, scoped, tag = 'internal scratch']
  %s0 = inlined_call_operand.vmem [shape: bf16[2,16,384], index: 0, kind: input, shape index: {}]
  %s1 = inlined_call_operand.vmem [shape: bf16[2,16,384], index: 1, kind: input, shape index: {}]
  %s2 = inlined_call_operand.vmem [shape: bf16[2,16,384], index: 2, kind: input, shape index: {}]
  %s3 = inlined_call_operand.vmem [shape: bf16[2,16,384], index: 3, kind: input, shape index: {}]
  %s4 = inlined_call_operand.vmem [shape: f32[9,256], index: 4, kind: input, shape index: {}]
  %s5 = inlined_call_operand.vmem [shape: f32[1,256], index: 5, kind: input, shape index: {}]
  %s6 = inlined_call_operand.vmem [shape: bf16[128,256], index: 6, kind: input, shape index: {}]
  %s7 = inlined_call_operand.vmem [shape: f32[1,512], index: 7, kind: input, shape index: {}]
  %s8 = inlined_call_operand.vmem [shape: f32[384,32], index: 8, kind: input, shape index: {}]
  %s9 = inlined_call_operand.vmem [shape: f32[32,8], index: 9, kind: input, shape index: {}]
  %s10 = inlined_call_operand.vmem [shape: f32[1,8], index: 10, kind: input, shape index: {}]
  %s11 = inlined_call_operand.vmem [shape: f32[8,32], index: 11, kind: input, shape index: {}]
  %s12 = inlined_call_operand.vmem [shape: f32[1,32], index: 12, kind: input, shape index: {}]
  %s13 = inlined_call_operand.vmem [shape: f32[2,8,512], index: 13, kind: output, shape index: {0}]
  %s14 = inlined_call_operand.hbm [shape: f32[2,1,32], index: 14, kind: output, shape index: {1}]
  %15 = xla_tuple %s13, %s14
  %s16 = sld [smem:[#allocation0]]
  $region93: #{_forward_s2_impl.1} parent=0
    _
  %s18 = ssub.s32 1, %s16
  %s19 = scalar_select 0, %s18, %s16
  $region1: #{_forward_s2_impl.1} parent=0
    #allocation2 [shape = 'u8[1024]{0}', space=vmem, size = 0x400, scoped, tag = 'output window, operand 1']
    #allocation3 [shape = 's32[2]{0}', space=sflag, size = 0x8, scoped, tag = 'scoped memory for _forward_s2_impl.1']
    %20 = vsyncpa [#allocation3], 0
    %s21 = scalar_lea.sflag [#allocation3], 1
    %22 = vsyncpa %s21, 0
    loop: start=0, step=1, limit=4
    $region2: #{_forward_s2_impl.1} parent=1 // loop_pre_header
      _
    $region3: #{_forward_s2_impl.1} parent=1 // loop_header
      %s24 = sphi 0, %s28
      %p25 = scmp.ge.s32.totalorder %s24, 4
      %s34 = sphi 0, %s36
      %s37 = sphi 0, %s34
      %s38 = sphi 0, %s37
      %s54 = sphi 0, %s38
      %s60 = sphi 0, %s62
      %s63 = sphi 0, %s60
      %s64 = sphi 0, %s63
      %s80 = sphi 0, %s64
      %s86 = sphi 0, %s88
      %s89 = sphi 0, %s86
      %s90 = sphi 0, %s89
      %s106 = sphi 0, %s90
      %s112 = sphi 0, %s114
      %s115 = sphi 0, %s112
      %s116 = sphi 0, %s115
      %s132 = sphi 0, %s116
      %s136 = sphi 0, %s136
      %s138 = sphi 0, %s136
      %s139 = sphi 0, %s138
      %s153 = sphi 0, %s139
      %s157 = sphi 0, %s157
      %s159 = sphi 0, %s157
      %s160 = sphi 0, %s159
      %s174 = sphi 0, %s160
      %s178 = sphi 0, %s178
      %s180 = sphi 0, %s178
      %s181 = sphi 0, %s180
      %s195 = sphi 0, %s181
      %s199 = sphi 0, %s199
      %s201 = sphi 0, %s199
      %s202 = sphi 0, %s201
      %s216 = sphi 0, %s202
      %s220 = sphi 0, %s220
      %s222 = sphi 0, %s220
      %s223 = sphi 0, %s222
      %s237 = sphi 0, %s223
      %s241 = sphi 0, %s241
      %s243 = sphi 0, %s241
      %s244 = sphi 0, %s243
      %s258 = sphi 0, %s244
      %s262 = sphi 0, %s262
      %s264 = sphi 0, %s262
      %s265 = sphi 0, %s264
      %s279 = sphi 0, %s265
      %s283 = sphi 0, %s283
      %s285 = sphi 0, %s283
      %s286 = sphi 0, %s285
      %s300 = sphi 0, %s286
      %s304 = sphi 0, %s304
      %s306 = sphi 0, %s304
      %s307 = sphi 0, %s306
      %s321 = sphi 0, %s307
      %s327 = sphi 0, %s329
      %s330 = sphi 0, %s327
      %s331 = sphi 0, %s330
      %s347 = sphi 0, %s331
      %s353 = sphi 0, %s355
      %s356 = sphi 0, %s353
      %s357 = sphi 0, %s356
      %s373 = sphi 0, %s357
    $region4: #{_forward_s2_impl.1} parent=1 // loop_header_branch
      %27 = sbr.rel (%p25) target = $region8
    $region5: #{_forward_s2_impl.1} parent=1 // loop_body
      %s29 = ssub.s32 %s24, 1
      %s30 = ssub.s32 %s24, 2
      %s31 = sadd.s32 %s24, 1
      %s32 = ssub.s32 %s24, %s31
      %p33 = scmp.eq.s32.totalorder %s32, 0
      %s35 = sadd.s32 %s34, 1
      %s36 = scalar_select %p33, %s34, %s35
      %p39 = pneg %p33
      %p40 = scmp.eq.s32.totalorder %s24, 1
      %p41 = por %p39, %p40
      %p42 = scmp.ne.s32.totalorder %s34, %s37
      %p43 = scmp.eq.s32.totalorder %s24, 0
      %p44 = por %p42, %p43
      %p45 = scmp.ne.s32.totalorder %s34, %s37
      %p46 = scmp.eq.s32.totalorder %s29, 1
      %p47 = por %p45, %p46
      %p48 = scmp.ne.s32.totalorder %s37, %s38
      %p49 = scmp.eq.s32.totalorder %s29, 0
      %p50 = por %p48, %p49
      %p51 = scmp.ne.s32.totalorder %s37, %s38
      %p52 = scmp.eq.s32.totalorder %s30, 1
      %p53 = por %p51, %p52
      %p55 = scmp.ne.s32.totalorder %s38, %s54
      %p56 = scmp.eq.s32.totalorder %s30, 0
      %p57 = por %p55, %p56
      %s58 = ssub.s32 %s24, %s31
      %p59 = scmp.eq.s32.totalorder %s58, 0
      %s61 = sadd.s32 %s60, 1
      %s62 = scalar_select %p59, %s60, %s61
      %p65 = pneg %p59
      %p66 = scmp.eq.s32.totalorder %s24, 1
      %p67 = por %p65, %p66
      %p68 = scmp.ne.s32.totalorder %s60, %s63
      %p69 = scmp.eq.s32.totalorder %s24, 0
      %p70 = por %p68, %p69
      %p71 = scmp.ne.s32.totalorder %s60, %s63
      %p72 = scmp.eq.s32.totalorder %s29, 1
      %p73 = por %p71, %p72
      %p74 = scmp.ne.s32.totalorder %s63, %s64
      %p75 = scmp.eq.s32.totalorder %s29, 0
      %p76 = por %p74, %p75
      %p77 = scmp.ne.s32.totalorder %s63, %s64
      %p78 = scmp.eq.s32.totalorder %s30, 1
      %p79 = por %p77, %p78
      %p81 = scmp.ne.s32.totalorder %s64, %s80
      %p82 = scmp.eq.s32.totalorder %s30, 0
      %p83 = por %p81, %p82
      %s84 = ssub.s32 %s24, %s31
      %p85 = scmp.eq.s32.totalorder %s84, 0
      %s87 = sadd.s32 %s86, 1
      %s88 = scalar_select %p85, %s86, %s87
      %p91 = pneg %p85
      %p92 = scmp.eq.s32.totalorder %s24, 1
      %p93 = por %p91, %p92
      %p94 = scmp.ne.s32.totalorder %s86, %s89
      %p95 = scmp.eq.s32.totalorder %s24, 0
      %p96 = por %p94, %p95
      %p97 = scmp.ne.s32.totalorder %s86, %s89
      %p98 = scmp.eq.s32.totalorder %s29, 1
      %p99 = por %p97, %p98
      %p100 = scmp.ne.s32.totalorder %s89, %s90
      %p101 = scmp.eq.s32.totalorder %s29, 0
      %p102 = por %p100, %p101
      %p103 = scmp.ne.s32.totalorder %s89, %s90
      %p104 = scmp.eq.s32.totalorder %s30, 1
      %p105 = por %p103, %p104
      %p107 = scmp.ne.s32.totalorder %s90, %s106
      %p108 = scmp.eq.s32.totalorder %s30, 0
      %p109 = por %p107, %p108
      %s110 = ssub.s32 %s24, %s31
      %p111 = scmp.eq.s32.totalorder %s110, 0
      %s113 = sadd.s32 %s112, 1
      %s114 = scalar_select %p111, %s112, %s113
      %p117 = pneg %p111
      %p118 = scmp.eq.s32.totalorder %s24, 1
      %p119 = por %p117, %p118
      %p120 = scmp.ne.s32.totalorder %s112, %s115
      %p121 = scmp.eq.s32.totalorder %s24, 0
      %p122 = por %p120, %p121
      %p123 = scmp.ne.s32.totalorder %s112, %s115
      %p124 = scmp.eq.s32.totalorder %s29, 1
      %p125 = por %p123, %p124
      %p126 = scmp.ne.s32.totalorder %s115, %s116
      %p127 = scmp.eq.s32.totalorder %s29, 0
      %p128 = por %p126, %p127
      %p129 = scmp.ne.s32.totalorder %s115, %s116
      %p130 = scmp.eq.s32.totalorder %s30, 1
      %p131 = por %p129, %p130
      %p133 = scmp.ne.s32.totalorder %s116, %s132
      %p134 = scmp.eq.s32.totalorder %s30, 0
      %p135 = por %p133, %p134
      %s137 = sadd.s32 %s136, 1
      %p140 = scmp.eq.s32.totalorder %s24, 1
      %p141 = scmp.ne.s32.totalorder %s136, %s138
      %p142 = scmp.eq.s32.totalorder %s24, 0
      %p143 = por %p141, %p142
      %p144 = scmp.ne.s32.totalorder %s136, %s138
      %p145 = scmp.eq.s32.totalorder %s29, 1
      %p146 = por %p144, %p145
      %p147 = scmp.ne.s32.totalorder %s138, %s139
      %p148 = scmp.eq.s32.totalorder %s29, 0
      %p149 = por %p147, %p148
      %p150 = scmp.ne.s32.totalorder %s138, %s139
      %p151 = scmp.eq.s32.totalorder %s30, 1
      %p152 = por %p150, %p151
      %p154 = scmp.ne.s32.totalorder %s139, %s153
      %p155 = scmp.eq.s32.totalorder %s30, 0
      %p156 = por %p154, %p155
      %s158 = sadd.s32 %s157, 1
      %p161 = scmp.eq.s32.totalorder %s24, 1
      %p162 = scmp.ne.s32.totalorder %s157, %s159
      %p163 = scmp.eq.s32.totalorder %s24, 0
      %p164 = por %p162, %p163
      %p165 = scmp.ne.s32.totalorder %s157, %s159
      %p166 = scmp.eq.s32.totalorder %s29, 1
      %p167 = por %p165, %p166
      %p168 = scmp.ne.s32.totalorder %s159, %s160
      %p169 = scmp.eq.s32.totalorder %s29, 0
      %p170 = por %p168, %p169
      %p171 = scmp.ne.s32.totalorder %s159, %s160
      %p172 = scmp.eq.s32.totalorder %s30, 1
      %p173 = por %p171, %p172
      %p175 = scmp.ne.s32.totalorder %s160, %s174
      %p176 = scmp.eq.s32.totalorder %s30, 0
      %p177 = por %p175, %p176
      %s179 = sadd.s32 %s178, 1
      %p182 = scmp.eq.s32.totalorder %s24, 1
      %p183 = scmp.ne.s32.totalorder %s178, %s180
      %p184 = scmp.eq.s32.totalorder %s24, 0
      %p185 = por %p183, %p184
      %p186 = scmp.ne.s32.totalorder %s178, %s180
      %p187 = scmp.eq.s32.totalorder %s29, 1
      %p188 = por %p186, %p187
      %p189 = scmp.ne.s32.totalorder %s180, %s181
      %p190 = scmp.eq.s32.totalorder %s29, 0
      %p191 = por %p189, %p190
      %p192 = scmp.ne.s32.totalorder %s180, %s181
      %p193 = scmp.eq.s32.totalorder %s30, 1
      %p194 = por %p192, %p193
      %p196 = scmp.ne.s32.totalorder %s181, %s195
      %p197 = scmp.eq.s32.totalorder %s30, 0
      %p198 = por %p196, %p197
      %s200 = sadd.s32 %s199, 1
      %p203 = scmp.eq.s32.totalorder %s24, 1
      %p204 = scmp.ne.s32.totalorder %s199, %s201
      %p205 = scmp.eq.s32.totalorder %s24, 0
      %p206 = por %p204, %p205
      %p207 = scmp.ne.s32.totalorder %s199, %s201
      %p208 = scmp.eq.s32.totalorder %s29, 1
      %p209 = por %p207, %p208
      %p210 = scmp.ne.s32.totalorder %s201, %s202
      %p211 = scmp.eq.s32.totalorder %s29, 0
      %p212 = por %p210, %p211
      %p213 = scmp.ne.s32.totalorder %s201, %s202
      %p214 = scmp.eq.s32.totalorder %s30, 1
      %p215 = por %p213, %p214
      %p217 = scmp.ne.s32.totalorder %s202, %s216
      %p218 = scmp.eq.s32.totalorder %s30, 0
      %p219 = por %p217, %p218
      %s221 = sadd.s32 %s220, 1
      %p224 = scmp.eq.s32.totalorder %s24, 1
      %p225 = scmp.ne.s32.totalorder %s220, %s222
      %p226 = scmp.eq.s32.totalorder %s24, 0
      %p227 = por %p225, %p226
      %p228 = scmp.ne.s32.totalorder %s220, %s222
      %p229 = scmp.eq.s32.totalorder %s29, 1
      %p230 = por %p228, %p229
      %p231 = scmp.ne.s32.totalorder %s222, %s223
      %p232 = scmp.eq.s32.totalorder %s29, 0
      %p233 = por %p231, %p232
      %p234 = scmp.ne.s32.totalorder %s222, %s223
      %p235 = scmp.eq.s32.totalorder %s30, 1
      %p236 = por %p234, %p235
      %p238 = scmp.ne.s32.totalorder %s223, %s237
      %p239 = scmp.eq.s32.totalorder %s30, 0
      %p240 = por %p238, %p239
      %s242 = sadd.s32 %s241, 1
      %p245 = scmp.eq.s32.totalorder %s24, 1
      %p246 = scmp.ne.s32.totalorder %s241, %s243
      %p247 = scmp.eq.s32.totalorder %s24, 0
      %p248 = por %p246, %p247
      %p249 = scmp.ne.s32.totalorder %s241, %s243
      %p250 = scmp.eq.s32.totalorder %s29, 1
      %p251 = por %p249, %p250
      %p252 = scmp.ne.s32.totalorder %s243, %s244
      %p253 = scmp.eq.s32.totalorder %s29, 0
      %p254 = por %p252, %p253
      %p255 = scmp.ne.s32.totalorder %s243, %s244
      %p256 = scmp.eq.s32.totalorder %s30, 1
      %p257 = por %p255, %p256
      %p259 = scmp.ne.s32.totalorder %s244, %s258
      %p260 = scmp.eq.s32.totalorder %s30, 0
      %p261 = por %p259, %p260
      %s263 = sadd.s32 %s262, 1
      %p266 = scmp.eq.s32.totalorder %s24, 1
      %p267 = scmp.ne.s32.totalorder %s262, %s264
      %p268 = scmp.eq.s32.totalorder %s24, 0
      %p269 = por %p267, %p268
      %p270 = scmp.ne.s32.totalorder %s262, %s264
      %p271 = scmp.eq.s32.totalorder %s29, 1
      %p272 = por %p270, %p271
      %p273 = scmp.ne.s32.totalorder %s264, %s265
      %p274 = scmp.eq.s32.totalorder %s29, 0
      %p275 = por %p273, %p274
      %p276 = scmp.ne.s32.totalorder %s264, %s265
      %p277 = scmp.eq.s32.totalorder %s30, 1
      %p278 = por %p276, %p277
      %p280 = scmp.ne.s32.totalorder %s265, %s279
      %p281 = scmp.eq.s32.totalorder %s30, 0
      %p282 = por %p280, %p281
      %s284 = sadd.s32 %s283, 1
      %p287 = scmp.eq.s32.totalorder %s24, 1
      %p288 = scmp.ne.s32.totalorder %s283, %s285
      %p289 = scmp.eq.s32.totalorder %s24, 0
      %p290 = por %p288, %p289
      %p291 = scmp.ne.s32.totalorder %s283, %s285
      %p292 = scmp.eq.s32.totalorder %s29, 1
      %p293 = por %p291, %p292
      %p294 = scmp.ne.s32.totalorder %s285, %s286
      %p295 = scmp.eq.s32.totalorder %s29, 0
      %p296 = por %p294, %p295
      %p297 = scmp.ne.s32.totalorder %s285, %s286
      %p298 = scmp.eq.s32.totalorder %s30, 1
      %p299 = por %p297, %p298
      %p301 = scmp.ne.s32.totalorder %s286, %s300
      %p302 = scmp.eq.s32.totalorder %s30, 0
      %p303 = por %p301, %p302
      %s305 = sadd.s32 %s304, 1
      %p308 = scmp.eq.s32.totalorder %s24, 1
      %p309 = scmp.ne.s32.totalorder %s304, %s306
      %p310 = scmp.eq.s32.totalorder %s24, 0
      %p311 = por %p309, %p310
      %p312 = scmp.ne.s32.totalorder %s304, %s306
      %p313 = scmp.eq.s32.totalorder %s29, 1
      %p314 = por %p312, %p313
      %p315 = scmp.ne.s32.totalorder %s306, %s307
      %p316 = scmp.eq.s32.totalorder %s29, 0
      %p317 = por %p315, %p316
      %p318 = scmp.ne.s32.totalorder %s306, %s307
      %p319 = scmp.eq.s32.totalorder %s30, 1
      %p320 = por %p318, %p319
      %p322 = scmp.ne.s32.totalorder %s307, %s321
      %p323 = scmp.eq.s32.totalorder %s30, 0
      %p324 = por %p322, %p323
      %s325 = ssub.s32 %s24, %s31
      %p326 = scmp.eq.s32.totalorder %s325, 0
      %s328 = sadd.s32 %s327, 1
      %s329 = scalar_select %p326, %s327, %s328
      %p332 = pneg %p326
      %p333 = scmp.eq.s32.totalorder %s24, 1
      %p334 = por %p332, %p333
      %p335 = scmp.ne.s32.totalorder %s327, %s330
      %p336 = scmp.eq.s32.totalorder %s24, 0
      %p337 = por %p335, %p336
      %p338 = scmp.ne.s32.totalorder %s327, %s330
      %p339 = scmp.eq.s32.totalorder %s29, 1
      %p340 = por %p338, %p339
      %p341 = scmp.ne.s32.totalorder %s330, %s331
      %p342 = scmp.eq.s32.totalorder %s29, 0
      %p343 = por %p341, %p342
      %p344 = scmp.ne.s32.totalorder %s330, %s331
      %p345 = scmp.eq.s32.totalorder %s30, 1
      %p346 = por %p344, %p345
      %p348 = scmp.ne.s32.totalorder %s331, %s347
      %p349 = scmp.eq.s32.totalorder %s30, 0
      %p350 = por %p348, %p349
      %s351 = ssub.s32 %s24, %s31
      %p352 = scmp.eq.s32.totalorder %s351, 0
      %s354 = sadd.s32 %s353, 1
      %s355 = scalar_select %p352, %s353, %s354
      %p358 = pneg %p352
      %p359 = scmp.eq.s32.totalorder %s24, 1
      %p360 = por %p358, %p359
      %p361 = scmp.ne.s32.totalorder %s353, %s356
      %p362 = scmp.eq.s32.totalorder %s24, 0
      %p363 = por %p361, %p362
      %p364 = scmp.ne.s32.totalorder %s353, %s356
      %p365 = scmp.eq.s32.totalorder %s29, 1
      %p366 = por %p364, %p365
      %p367 = scmp.ne.s32.totalorder %s356, %s357
      %p368 = scmp.eq.s32.totalorder %s29, 0
      %p369 = por %p367, %p368
      %p370 = scmp.ne.s32.totalorder %s356, %s357
      %p371 = scmp.eq.s32.totalorder %s30, 1
      %p372 = por %p370, %p371
      %p374 = scmp.ne.s32.totalorder %s357, %s373
      %p375 = scmp.eq.s32.totalorder %s30, 0
      %p376 = por %p374, %p375
      %p377 = scmp.le.s32.totalorder 1, %s24
      %p378 = scmp.lt.s32.totalorder %s24, 3
      %p379 = pnand %p377, %p378
      %p380 = pneg %p379
      // Predicated region
      $region9: #{_forward_s2_impl.1} parent=5 // pred_check
        _
      $region10: #{_forward_s2_impl.1} parent=5 // pred_check_branch
        %382 = sbr.rel (%p379) target = $region12
      $region11: #{_forward_s2_impl.1} parent=5 // pred_region
        %s383 = ssub.s32 %s24, 1
        // Predicated region
        $region13: #{_forward_s2_impl.1} parent=11 // pred_check
          %p384 = pneg %p149
        $region14: #{_forward_s2_impl.1} parent=11 // pred_check_branch
          %386 = sbr.rel (%p384) target = $region16
        $region15: #{_forward_s2_impl.1} parent=11 // pred_region
          _
        $region16: #{_forward_s2_impl.1} parent=11 // pred_fallthru
          _
        // Predicated region
        $region17: #{_forward_s2_impl.1} parent=11 // pred_check
          %p387 = pneg %p170
        $region18: #{_forward_s2_impl.1} parent=11 // pred_check_branch
          %389 = sbr.rel (%p387) target = $region20
        $region19: #{_forward_s2_impl.1} parent=11 // pred_region
          _
        $region20: #{_forward_s2_impl.1} parent=11 // pred_fallthru
          _
        // Predicated region
        $region21: #{_forward_s2_impl.1} parent=11 // pred_check
          %p390 = pneg %p191
        $region22: #{_forward_s2_impl.1} parent=11 // pred_check_branch
          %392 = sbr.rel (%p390) target = $region24
        $region23: #{_forward_s2_impl.1} parent=11 // pred_region
          _
        $region24: #{_forward_s2_impl.1} parent=11 // pred_fallthru
          _
        // Predicated region
        $region25: #{_forward_s2_impl.1} parent=11 // pred_check
          %p393 = pneg %p212
        $region26: #{_forward_s2_impl.1} parent=11 // pred_check_branch
          %395 = sbr.rel (%p393) target = $region28
        $region27: #{_forward_s2_impl.1} parent=11 // pred_region
          _
        $region28: #{_forward_s2_impl.1} parent=11 // pred_fallthru
          _
        // Predicated region
        $region29: #{_forward_s2_impl.1} parent=11 // pred_check
          %p396 = pneg %p233
        $region30: #{_forward_s2_impl.1} parent=11 // pred_check_branch
          %398 = sbr.rel (%p396) target = $region32
        $region31: #{_forward_s2_impl.1} parent=11 // pred_region
          _
        $region32: #{_forward_s2_impl.1} parent=11 // pred_fallthru
          _
        // Predicated region
        $region33: #{_forward_s2_impl.1} parent=11 // pred_check
          %p399 = pneg %p254
        $region34: #{_forward_s2_impl.1} parent=11 // pred_check_branch
          %401 = sbr.rel (%p399) target = $region36
        $region35: #{_forward_s2_impl.1} parent=11 // pred_region
          _
        $region36: #{_forward_s2_impl.1} parent=11 // pred_fallthru
          _
        // Predicated region
        $region37: #{_forward_s2_impl.1} parent=11 // pred_check
          %p402 = pneg %p275
        $region38: #{_forward_s2_impl.1} parent=11 // pred_check_branch
          %404 = sbr.rel (%p402) target = $region40
        $region39: #{_forward_s2_impl.1} parent=11 // pred_region
          _
        $region40: #{_forward_s2_impl.1} parent=11 // pred_fallthru
          _
        // Predicated region
        $region41: #{_forward_s2_impl.1} parent=11 // pred_check
          %p405 = pneg %p296
        $region42: #{_forward_s2_impl.1} parent=11 // pred_check_branch
          %407 = sbr.rel (%p405) target = $region44
        $region43: #{_forward_s2_impl.1} parent=11 // pred_region
          _
        $region44: #{_forward_s2_impl.1} parent=11 // pred_fallthru
          _
        // Predicated region
        $region45: #{_forward_s2_impl.1} parent=11 // pred_check
          %p408 = pneg %p317
        $region46: #{_forward_s2_impl.1} parent=11 // pred_check_branch
          %410 = sbr.rel (%p408) target = $region48
        $region47: #{_forward_s2_impl.1} parent=11 // pred_region
          _
        $region48: #{_forward_s2_impl.1} parent=11 // pred_fallthru
          _
      $region12: #{_forward_s2_impl.1} parent=5 // pred_fallthru
        _
      %p411 = scmp.lt.s32.totalorder %s24, 2
      // Predicated region
      $region49: #{_forward_s2_impl.1} parent=5 // pred_check
        %p412 = pneg %p411
      $region50: #{_forward_s2_impl.1} parent=5 // pred_check_branch
        %414 = sbr.rel (%p412) target = $region52
      $region51: #{_forward_s2_impl.1} parent=5 // pred_region
        // Predicated region
        $region53: #{_forward_s2_impl.1} parent=51 // pred_check
          %p415 = pneg %p44
        $region54: #{_forward_s2_impl.1} parent=51 // pred_check_branch
          %417 = sbr.rel (%p415) target = $region56
        $region55: #{_forward_s2_impl.1} parent=51 // pred_region
          %p418 = scmp.lt.s32.totalorder %s24, 1
          %s419 = scalar_select %p418, %s24, 1
          %s420 = smul.addr %s419, 6
          %s421 = smul.addr %s420, 4
          %s422 = scalar_lea.vmem %s0, %s421
        $region56: #{_forward_s2_impl.1} parent=51 // pred_fallthru
          _
        // Predicated region
        $region57: #{_forward_s2_impl.1} parent=51 // pred_check
          %p423 = pneg %p70
        $region58: #{_forward_s2_impl.1} parent=51 // pred_check_branch
          %425 = sbr.rel (%p423) target = $region60
        $region59: #{_forward_s2_impl.1} parent=51 // pred_region
          %p426 = scmp.lt.s32.totalorder %s24, 1
          %s427 = scalar_select %p426, %s24, 1
          %s428 = smul.addr %s427, 6
          %s429 = smul.addr %s428, 4
          %s430 = scalar_lea.vmem %s1, %s429
        $region60: #{_forward_s2_impl.1} parent=51 // pred_fallthru
          _
        // Predicated region
        $region61: #{_forward_s2_impl.1} parent=51 // pred_check
          %p431 = pneg %p96
        $region62: #{_forward_s2_impl.1} parent=51 // pred_check_branch
          %433 = sbr.rel (%p431) target = $region64
        $region63: #{_forward_s2_impl.1} parent=51 // pred_region
          %p434 = scmp.lt.s32.totalorder %s24, 1
          %s435 = scalar_select %p434, %s24, 1
          %s436 = smul.addr %s435, 6
          %s437 = smul.addr %s436, 4
          %s438 = scalar_lea.vmem %s2, %s437
        $region64: #{_forward_s2_impl.1} parent=51 // pred_fallthru
          _
        // Predicated region
        $region65: #{_forward_s2_impl.1} parent=51 // pred_check
          %p439 = pneg %p122
        $region66: #{_forward_s2_impl.1} parent=51 // pred_check_branch
          %441 = sbr.rel (%p439) target = $region68
        $region67: #{_forward_s2_impl.1} parent=51 // pred_region
          %p442 = scmp.lt.s32.totalorder %s24, 1
          %s443 = scalar_select %p442, %s24, 1
          %s444 = smul.addr %s443, 6
          %s445 = smul.addr %s444, 4
          %s446 = scalar_lea.vmem %s3, %s445
        $region68: #{_forward_s2_impl.1} parent=51 // pred_fallthru
          _
      $region52: #{_forward_s2_impl.1} parent=5 // pred_fallthru
        _
      %p447 = scmp.le.s32.totalorder 1, %s24
      %p448 = scmp.lt.s32.totalorder %s24, 3
      %p449 = pnand %p447, %p448
      %p450 = pneg %p449
      // Predicated region
      $region69: #{_forward_s2_impl.1} parent=5 // pred_check
        _
      $region70: #{_forward_s2_impl.1} parent=5 // pred_check_branch
        %452 = sbr.rel (%p449) target = $region72
      $region71: #{_forward_s2_impl.1} parent=5 // pred_region
        %s453 = ssub.s32 %s24, 1
        %p454 = scmp.lt.s32.totalorder %s29, 1
        %s455 = scalar_select %p454, %s29, 1
        %s456 = smul.addr %s455, 6
        %s457 = smul.addr %s456, 4
        %s458 = scalar_lea.vmem %s0, %s457
        %p459 = pneg %p50
        %p460 = pneg %p47
        %p461 = scmp.lt.s32.totalorder %s29, 1
        %s462 = scalar_select %p461, %s29, 1
        %s463 = smul.addr %s462, 6
        %s464 = smul.addr %s463, 4
        %s465 = scalar_lea.vmem %s1, %s464
        %p466 = pneg %p76
        %p467 = pneg %p73
        %p468 = scmp.lt.s32.totalorder %s29, 1
        %s469 = scalar_select %p468, %s29, 1
        %s470 = smul.addr %s469, 6
        %s471 = smul.addr %s470, 4
        %s472 = scalar_lea.vmem %s2, %s471
        %p473 = pneg %p102
        %p474 = pneg %p99
        %p475 = scmp.lt.s32.totalorder %s29, 1
        %s476 = scalar_select %p475, %s29, 1
        %s477 = smul.addr %s476, 6
        %s478 = smul.addr %s477, 4
        %s479 = scalar_lea.vmem %s3, %s478
        %p480 = pneg %p128
        %p481 = pneg %p125
        %p482 = pneg %p149
        %p483 = pneg %p146
        %p484 = pneg %p170
        %p485 = pneg %p167
        %p486 = pneg %p191
        %p487 = pneg %p188
        %p488 = pneg %p212
        %p489 = pneg %p209
        %p490 = pneg %p233
        %p491 = pneg %p230
        %p492 = pneg %p254
        %p493 = pneg %p251
        %p494 = pneg %p275
        %p495 = pneg %p272
        %p496 = pneg %p296
        %p497 = pneg %p293
        %p498 = pneg %p317
        %p499 = pneg %p314
        %p500 = pneg %p343
        %p501 = pneg %p340
        %p502 = scmp.lt.s32.totalorder %s29, 1
        %s503 = scalar_select %p502, %s29, 1
        %s504 = smul.addr %s503, 4
        %s505 = smul.addr %s504, 8
        %s506 = scalar_lea.vmem %s13, %s505
        %p507 = pneg %p369
        %p508 = pneg %p366
        %s509 = sand.u32 %s356, 1
        %s510 = scalar_lea.sflag [#allocation3], %s509
        %s511 = sand.u32 %s356, 1
        %s512 = scalar_lea.vmem [#allocation2], %s511
        %p513 = scmp.lt.s32.totalorder %s29, 1
        %s514 = scalar_select %p513, %s29, 1
        %s515 = smul.addr %s514, 6
        %s516 = smul.addr %s515, 4
        %s517 = scalar_lea.vmem %s0, %s516
        %p518 = scmp.lt.s32.totalorder %s29, 1
        %s519 = scalar_select %p518, %s29, 1
        %s520 = smul.addr %s519, 6
        %s521 = smul.addr %s520, 4
        %s522 = scalar_lea.vmem %s1, %s521
        %p523 = scmp.lt.s32.totalorder %s29, 1
        %s524 = scalar_select %p523, %s29, 1
        %s525 = smul.addr %s524, 6
        %s526 = smul.addr %s525, 4
        %s527 = scalar_lea.vmem %s2, %s526
        %p528 = scmp.lt.s32.totalorder %s29, 1
        %s529 = scalar_select %p528, %s29, 1
        %s530 = smul.addr %s529, 6
        %s531 = smul.addr %s530, 4
        %s532 = scalar_lea.vmem %s3, %s531
        %p533 = scmp.lt.s32.totalorder %s29, 1
        %s534 = scalar_select %p533, %s29, 1
        %s535 = smul.addr %s534, 4
        %s536 = smul.addr %s535, 8
        %s537 = scalar_lea.vmem %s13, %s536
        %v539 = vld [vmem:[%s517] sm:$0xff]
        %v540 = vld [vmem:[%s517 + $0x8] sm:$0xf]
        %v541 = vld [vmem:[%s517 + $0xc] sm:$0xff]
        %v542 = vld [vmem:[%s517 + $0x14] sm:$0xf]
        %v543 = vunpack.c.l.bf16 %v539
        %v544 = vunpack.c.h.bf16 %v539
        %v545 = vunpack.c.l.bf16 %v540
        %v546 = vunpack.c.l.bf16 %v541
        %v547 = vunpack.c.h.bf16 %v541
        %v548 = vunpack.c.l.bf16 %v542
        %v549 = vld [vmem:[%s522] sm:$0xff]
        %v550 = vld [vmem:[%s522 + $0x8] sm:$0xf]
        %v551 = vld [vmem:[%s522 + $0xc] sm:$0xff]
        %v552 = vld [vmem:[%s522 + $0x14] sm:$0xf]
        %v553 = vunpack.c.l.bf16 %v549
        %v554 = vunpack.c.h.bf16 %v549
        %v555 = vunpack.c.l.bf16 %v550
        %v556 = vunpack.c.l.bf16 %v551
        %v557 = vunpack.c.h.bf16 %v551
        %v558 = vunpack.c.l.bf16 %v552
        %v559 = vld [vmem:[%s527] sm:$0xff]
        %v560 = vld [vmem:[%s527 + $0x8] sm:$0xf]
        %v561 = vld [vmem:[%s527 + $0xc] sm:$0xff]
        %v562 = vld [vmem:[%s527 + $0x14] sm:$0xf]
        %v563 = vunpack.c.l.bf16 %v559
        %v564 = vunpack.c.h.bf16 %v559
        %v565 = vunpack.c.l.bf16 %v560
        %v566 = vunpack.c.l.bf16 %v561
        %v567 = vunpack.c.h.bf16 %v561
        %v568 = vunpack.c.l.bf16 %v562
        %v569 = vld [vmem:[%s532] sm:$0xff]
        %v570 = vld [vmem:[%s532 + $0x8] sm:$0xf]
        %v571 = vld [vmem:[%s532 + $0xc] sm:$0xff]
        %v572 = vld [vmem:[%s532 + $0x14] sm:$0xf]
        %v573 = vunpack.c.l.bf16 %v569
        %v574 = vunpack.c.h.bf16 %v569
        %v575 = vunpack.c.l.bf16 %v570
        %v576 = vunpack.c.l.bf16 %v571
        %v577 = vunpack.c.h.bf16 %v571
        %v578 = vunpack.c.l.bf16 %v572
        %v579 = vld [vmem:[%s4] sm:$0xff]
        %v580 = vld [vmem:[%s4 + $0x8] sm:$0xff]
        %v581 = vld [vmem:[%s4 + $0x10] sm:$0x1]
        %v582 = vld [vmem:[%s4 + $0x18] sm:$0x1]
        %v583 = vlaneseq
        %v584 = vshrl.u32 %v583, 7
        %v585 = vsub.s32 0, %v584
        %v586 = vrot.slane %v579, %v585
        %v587 = vlaneseq
        %v588 = vshrl.u32 %v587, 7
        %v589 = vsub.s32 0, %v588
        %v590 = vrot.slane %v580, %v589
        %v591 = vmul.f32 %v543, %v586
        %v592 = vmul.f32 %v544, %v590
        %v593 = vld [vmem:[%s5] sm:$0x3]
        %v595 = vlaneseq
        %v596 = vshrl.u32 %v595, 7
        %v597 = vsub.s32 0, %v596
        %v598 = vrot.slane %v593, %v597
        %v599 = vlaneseq
        %v600 = vshrl.u32 %v599, 7
        %v601 = vsub.s32 1, %v600
        %v602 = vrot.slane %v593, %v601
        %v605 = vadd.f32 %v598, %v591
        %v606 = vadd.f32 %v602, %v592
        %v607 = vlaneseq
        %v608 = vshrl.u32 %v607, 7
        %v609 = vsub.s32 1, %v608
        %v610 = vrot.slane %v579, %v609
        %v611 = vlaneseq
        %v612 = vshrl.u32 %v611, 7
        %v613 = vsub.s32 1, %v612
        %v614 = vrot.slane %v580, %v613
        %v615 = vmul.f32 %v553, %v610
        %v616 = vmul.f32 %v554, %v614
        %v617 = vadd.f32 %v605, %v615
        %v618 = vadd.f32 %v606, %v616
        %619 = vrot.lane.b32.xlu0 %v543, 96
        %v620 = vpop.permute.xlu0 %619
        %621 = vrot.lane.b32.xlu0 %v544, 96
        %v622 = vpop.permute.xlu0 %621
        %623 = vrot.lane.b32.xlu0 %v545, 96
        %v624 = vpop.permute.xlu0 %623
        %v625 = vlaneseq
        %v626 = vand.u32 %v625, 127
        %vm627 = vcmp.lt.s32.totalorder %v626, 96
        %v628 = vsel %vm627, %v622, %v624
        %v629 = vsel %vm627, %v620, %v622
        %v630 = vlaneseq
        %v631 = vshrl.u32 %v630, 7
        %v632 = vsub.s32 2, %v631
        %v633 = vrot.slane %v579, %v632
        %v634 = vlaneseq
        %v635 = vshrl.u32 %v634, 7
        %v636 = vsub.s32 2, %v635
        %v637 = vrot.slane %v580, %v636
        %v638 = vmul.f32 %v629, %v633
        %v639 = vmul.f32 %v628, %v637
        %v640 = vadd.f32 %v617, %v638
        %v641 = vadd.f32 %v618, %v639
        %v642 = vlaneseq
        %v643 = vshrl.u32 %v642, 7
        %v644 = vsub.s32 3, %v643
        %v645 = vrot.slane %v579, %v644
        %v646 = vlaneseq
        %v647 = vshrl.u32 %v646, 7
        %v648 = vsub.s32 3, %v647
        %v649 = vrot.slane %v580, %v648
        %v650 = vmul.f32 %v563, %v645
        %v651 = vmul.f32 %v564, %v649
        %v652 = vadd.f32 %v640, %v650
        %v653 = vadd.f32 %v641, %v651
        %v654 = vlaneseq
        %v655 = vshrl.u32 %v654, 7
        %v656 = vsub.s32 4, %v655
        %v657 = vrot.slane %v579, %v656
        %v658 = vlaneseq
        %v659 = vshrl.u32 %v658, 7
        %v660 = vsub.s32 4, %v659
        %v661 = vrot.slane %v580, %v660
        %v662 = vmul.f32 %v573, %v657
        %v663 = vmul.f32 %v574, %v661
        %v664 = vadd.f32 %v652, %v662
        %v665 = vadd.f32 %v653, %v663
        %666 = vrot.lane.b32.xlu0 %v563, 96
        %v667 = vpop.permute.xlu0 %666
        %668 = vrot.lane.b32.xlu0 %v564, 96
        %v669 = vpop.permute.xlu0 %668
        %670 = vrot.lane.b32.xlu0 %v565, 96
        %v671 = vpop.permute.xlu0 %670
        %v672 = vsel %vm627, %v669, %v671
        %v673 = vsel %vm627, %v667, %v669
        %v674 = vlaneseq
        %v675 = vshrl.u32 %v674, 7
        %v676 = vsub.s32 5, %v675
        %v677 = vrot.slane %v579, %v676
        %v678 = vlaneseq
        %v679 = vshrl.u32 %v678, 7
        %v680 = vsub.s32 5, %v679
        %v681 = vrot.slane %v580, %v680
        %v682 = vmul.f32 %v673, %v677
        %v683 = vmul.f32 %v672, %v681
        %v684 = vadd.f32 %v664, %v682
        %v685 = vadd.f32 %v665, %v683
        %v686 = vrot.slane %v543, 1
        %v687 = vrot.slane %v544, 1
        %v688 = vrot.slane %v545, 1
        %v689 = vrot.slane %v546, 1
        %v690 = vrot.slane %v547, 1
        %v691 = vrot.slane %v548, 1
        %v692 = vlaneseq
        %v693 = vshrl.u32 %v692, 7
        %vm694 = vcmp.lt.s32.totalorder %v693, 7
        %v695 = vsel %vm694, %v686, %v689
        %v696 = vsel %vm694, %v687, %v690
        %v697 = vsel %vm694, %v688, %v691
        %v698 = vlaneseq
        %v699 = vshrl.u32 %v698, 7
        %v700 = vsub.s32 6, %v699
        %v701 = vrot.slane %v579, %v700
        %v702 = vlaneseq
        %v703 = vshrl.u32 %v702, 7
        %v704 = vsub.s32 6, %v703
        %v705 = vrot.slane %v580, %v704
        %v706 = vmul.f32 %v695, %v701
        %v707 = vmul.f32 %v696, %v705
        %v708 = vadd.f32 %v684, %v706
        %v709 = vadd.f32 %v685, %v707
        %v710 = vrot.slane %v553, 1
        %v711 = vrot.slane %v554, 1
        %v712 = vrot.slane %v556, 1
        %v713 = vrot.slane %v557, 1
        %v714 = vsel %vm694, %v710, %v712
        %v715 = vsel %vm694, %v711, %v713
        %v716 = vlaneseq
        %v717 = vshrl.u32 %v716, 7
        %v718 = vsub.s32 7, %v717
        %v719 = vrot.slane %v579, %v718
        %v720 = vlaneseq
        %v721 = vshrl.u32 %v720, 7
        %v722 = vsub.s32 7, %v721
        %v723 = vrot.slane %v580, %v722
        %v724 = vmul.f32 %v714, %v719
        %v725 = vmul.f32 %v715, %v723
        %v726 = vadd.f32 %v708, %v724
        %v727 = vadd.f32 %v709, %v725
        %728 = vrot.lane.b32.xlu0 %v695, 96
        %v729 = vpop.permute.xlu0 %728
        %730 = vrot.lane.b32.xlu0 %v696, 96
        %v731 = vpop.permute.xlu0 %730
        %732 = vrot.lane.b32.xlu0 %v697, 96
        %v733 = vpop.permute.xlu0 %732
        %v734 = vsel %vm627, %v731, %v733
        %v735 = vsel %vm627, %v729, %v731
        %v736 = vlaneseq
        %v737 = vshrl.u32 %v736, 7
        %v738 = vsub.s32 0, %v737
        %v739 = vrot.slane %v581, %v738
        %v740 = vlaneseq
        %v741 = vshrl.u32 %v740, 7
        %v742 = vsub.s32 0, %v741
        %v743 = vrot.slane %v582, %v742
        %v744 = vmul.f32 %v735, %v739
        %v745 = vmul.f32 %v734, %v743
        %v746 = vadd.f32 %v726, %v744
        %v747 = vadd.f32 %v727, %v745
        %v748 = vmax.f32 %v746, 0.0
        %v749 = vmax.f32 %v747, 0.0
        %v750 = vmin.f32 %v748, 6.0
        %v751 = vmin.f32 %v749, 6.0
        %v752 = vpack.c.bf16 %v750, %v750
        %v753 = vpack.c.bf16 %v751, %v751
        %v754 = vld [vmem:[%s6] sm:$0xff]
        %v755 = vld [vmem:[%s6 + $0x8] sm:$0xff]
        %v756 = vld [vmem:[%s6 + $0x10] sm:$0xff]
        %v757 = vld [vmem:[%s6 + $0x18] sm:$0xff]
        %v758 = vld [vmem:[%s6 + $0x20] sm:$0xff]
        %v759 = vld [vmem:[%s6 + $0x28] sm:$0xff]
        %v760 = vld [vmem:[%s6 + $0x30] sm:$0xff]
        %v761 = vld [vmem:[%s6 + $0x38] sm:$0xff]
        %v762 = vld [vmem:[%s6 + $0x40] sm:$0xff]
        %v763 = vld [vmem:[%s6 + $0x48] sm:$0xff]
        %v764 = vld [vmem:[%s6 + $0x50] sm:$0xff]
        %v765 = vld [vmem:[%s6 + $0x58] sm:$0xff]
        %v766 = vld [vmem:[%s6 + $0x60] sm:$0xff]
        %v767 = vld [vmem:[%s6 + $0x68] sm:$0xff]
        %v768 = vld [vmem:[%s6 + $0x70] sm:$0xff]
        %v769 = vld [vmem:[%s6 + $0x78] sm:$0xff]
        %v786 = vunpack.c.l.b16 %v754
        %v787 = vunpack.c.h.b16 %v754
        %v788 = vunpack.c.l.b16 %v755
        %v789 = vunpack.c.h.b16 %v755
        %v790 = vunpack.c.l.b16 %v756
        %v791 = vunpack.c.h.b16 %v756
        %v792 = vunpack.c.l.b16 %v757
        %v793 = vunpack.c.h.b16 %v757
        %v794 = vunpack.c.l.b16 %v758
        %v795 = vunpack.c.h.b16 %v758
        %v796 = vunpack.c.l.b16 %v759
        %v797 = vunpack.c.h.b16 %v759
        %v798 = vunpack.c.l.b16 %v760
        %v799 = vunpack.c.h.b16 %v760
        %v800 = vunpack.c.l.b16 %v761
        %v801 = vunpack.c.h.b16 %v761
        %v802 = vunpack.c.l.b16 %v762
        %v803 = vunpack.c.h.b16 %v762
        %v804 = vunpack.c.l.b16 %v763
        %v805 = vunpack.c.h.b16 %v763
        %v806 = vunpack.c.l.b16 %v764
        %v807 = vunpack.c.h.b16 %v764
        %v808 = vunpack.c.l.b16 %v765
        %v809 = vunpack.c.h.b16 %v765
        %v810 = vunpack.c.l.b16 %v766
        %v811 = vunpack.c.h.b16 %v766
        %v812 = vunpack.c.l.b16 %v767
        %v813 = vunpack.c.h.b16 %v767
        %v814 = vunpack.c.l.b16 %v768
        %v815 = vunpack.c.h.b16 %v768
        %v816 = vunpack.c.l.b16 %v769
        %v817 = vunpack.c.h.b16 %v769
        %v818 = vpack.c.b16 %v788, %v786
        %v819 = vpack.c.b16 %v789, %v787
        %v820 = vpack.c.b16 %v792, %v790
        %v821 = vpack.c.b16 %v793, %v791
        %v822 = vpack.c.b16 %v796, %v794
        %v823 = vpack.c.b16 %v797, %v795
        %v824 = vpack.c.b16 %v800, %v798
        %v825 = vpack.c.b16 %v801, %v799
        %v826 = vpack.c.b16 %v804, %v802
        %v827 = vpack.c.b16 %v805, %v803
        %v828 = vpack.c.b16 %v808, %v806
        %v829 = vpack.c.b16 %v809, %v807
        %v830 = vpack.c.b16 %v812, %v810
        %v831 = vpack.c.b16 %v813, %v811
        %v832 = vpack.c.b16 %v816, %v814
        %v833 = vpack.c.b16 %v817, %v815
        %850 = vmatprep.subr.bf16.mxu0 %v819
        %851 = vmatpush1.bf16.msra.mxu0 %v818
        %852 = vmatprep.subr.bf16.mxu0 %v821
        %853 = vmatpush1.bf16.msra.mxu0 %v820
        %854 = vmatprep.subr.bf16.mxu0 %v823
        %855 = vmatpush1.bf16.msra.mxu0 %v822
        %856 = vmatprep.subr.bf16.mxu0 %v825
        %857 = vmatpush1.bf16.msra.mxu0 %v824
        %858 = vmatprep.subr.bf16.mxu0 %v827
        %859 = vmatpush1.bf16.msra.mxu0 %v826
        %860 = vmatprep.subr.bf16.mxu0 %v829
        %861 = vmatpush1.bf16.msra.mxu0 %v828
        %862 = vmatprep.subr.bf16.mxu0 %v831
        %863 = vmatpush1.bf16.msra.mxu0 %v830
        %864 = vmatprep.subr.bf16.mxu0 %v833
        %865 = vmatpush1.bf16.msra.mxu0 %v832
        %866 = vmatprep.subr.bf16.mxu0 0
        %867 = vmatpush1.bf16.msra.mxu0 0
        %868 = vmatprep.subr.bf16.mxu0 0
        %869 = vmatpush1.bf16.msra.mxu0 0
        %870 = vmatprep.subr.bf16.mxu0 0
        %871 = vmatpush1.bf16.msra.mxu0 0
        %872 = vmatprep.subr.bf16.mxu0 0
        %873 = vmatpush1.bf16.msra.mxu0 0
        %874 = vmatprep.subr.bf16.mxu0 0
        %875 = vmatpush1.bf16.msra.mxu0 0
        %876 = vmatprep.subr.bf16.mxu0 0
        %877 = vmatpush1.bf16.msra.mxu0 0
        %878 = vmatprep.subr.bf16.mxu0 0
        %879 = vmatpush1.bf16.msra.mxu0 0
        %880 = vmatprep.subr.bf16.mxu0 0
        %881 = vmatpush1.bf16.msra.mxu0 0
        %882 = vmatprep.mubr.bf16.mxu0 0
        %883 = vmatmul.mubr.bf16.gmra.mrb[0].mxu0 %v752
        %v884 = vpop.f32.mrb[0].mxu0
        %v885 = vadd.f32 0.0, %v884
        %v886 = vpop.f32.mrb[0].mxu0
        %v887 = vadd.f32 0.0, %v886
        %v888 = vpop.f32.mrb[0].mxu0
        %v889 = vpop.f32.mrb[0].mxu0
        %890 = vdwg.mxu0
        %891 = vmatprep.subr.bf16.mxu0 %v819
        %892 = vmatpush1.bf16.msra.mxu0 %v818
        %893 = vmatprep.subr.bf16.mxu0 %v821
        %894 = vmatpush1.bf16.msra.mxu0 %v820
        %895 = vmatprep.subr.bf16.mxu0 %v823
        %896 = vmatpush1.bf16.msra.mxu0 %v822
        %897 = vmatprep.subr.bf16.mxu0 %v825
        %898 = vmatpush1.bf16.msra.mxu0 %v824
        %899 = vmatprep.subr.bf16.mxu0 %v827
        %900 = vmatpush1.bf16.msra.mxu0 %v826
        %901 = vmatprep.subr.bf16.mxu0 %v829
        %902 = vmatpush1.bf16.msra.mxu0 %v828
        %903 = vmatprep.subr.bf16.mxu0 %v831
        %904 = vmatpush1.bf16.msra.mxu0 %v830
        %905 = vmatprep.subr.bf16.mxu0 %v833
        %906 = vmatpush1.bf16.msra.mxu0 %v832
        %907 = vmatprep.subr.bf16.mxu0 0
        %908 = vmatpush1.bf16.msra.mxu0 0
        %909 = vmatprep.subr.bf16.mxu0 0
        %910 = vmatpush1.bf16.msra.mxu0 0
        %911 = vmatprep.subr.bf16.mxu0 0
        %912 = vmatpush1.bf16.msra.mxu0 0
        %913 = vmatprep.subr.bf16.mxu0 0
        %914 = vmatpush1.bf16.msra.mxu0 0
        %915 = vmatprep.subr.bf16.mxu0 0
        %916 = vmatpush1.bf16.msra.mxu0 0
        %917 = vmatprep.subr.bf16.mxu0 0
        %918 = vmatpush1.bf16.msra.mxu0 0
        %919 = vmatprep.subr.bf16.mxu0 0
        %920 = vmatpush1.bf16.msra.mxu0 0
        %921 = vmatprep.subr.bf16.mxu0 0
        %922 = vmatpush1.bf16.msra.mxu0 0
        %923 = vmatprep.mubr.bf16.mxu0 0
        %924 = vmatmul.mubr.bf16.gmra.mrb[0].mxu0 %v753
        %v925 = vpop.f32.mrb[0].mxu0
        %v926 = vadd.f32 0.0, %v925
        %v927 = vpop.f32.mrb[0].mxu0
        %v928 = vadd.f32 0.0, %v927
        %v929 = vpop.f32.mrb[0].mxu0
        %v930 = vpop.f32.mrb[0].mxu0
        %931 = vdwg.mxu0
        %v932 = vld [vmem:[%s7] sm:$0xf]
        %v934 = vlaneseq
        %v935 = vshrl.u32 %v934, 7
        %v936 = vsub.s32 0, %v935
        %v937 = vrot.slane %v932, %v936
        %v938 = vlaneseq
        %v939 = vshrl.u32 %v938, 7
        %v940 = vsub.s32 1, %v939
        %v941 = vrot.slane %v932, %v940
        %v942 = vlaneseq
        %v943 = vshrl.u32 %v942, 7
        %v944 = vsub.s32 2, %v943
        %v945 = vrot.slane %v932, %v944
        %v946 = vlaneseq
        %v947 = vshrl.u32 %v946, 7
        %v948 = vsub.s32 3, %v947
        %v949 = vrot.slane %v932, %v948
        %v954 = vadd.f32 %v885, %v937
        %v955 = vadd.f32 %v887, %v941
        %v956 = vadd.f32 %v926, %v945
        %v957 = vadd.f32 %v928, %v949
        %v958 = vmax.f32 %v954, 0.0
        %v959 = vmax.f32 %v955, 0.0
        %v960 = vmax.f32 %v956, 0.0
        %v961 = vmax.f32 %v957, 0.0
        %v962 = vmin.f32 %v958, 6.0
        %v963 = vmin.f32 %v959, 6.0
        %v964 = vmin.f32 %v960, 6.0
        %v965 = vmin.f32 %v961, 6.0
        %966 = vst [vmem:[%s537] sm:$0xff] %v962
        %967 = vst [vmem:[%s537 + $0x8] sm:$0xff] %v963
        %968 = vst [vmem:[%s537 + $0x10] sm:$0xff] %v964
        %969 = vst [vmem:[%s537 + $0x18] sm:$0xff] %v965
        %v970 = vadd.f32 %v543, %v546
        %v971 = vrot.slane %v970, 4
        %v972 = vadd.f32 %v970, %v971
        %v973 = vrot.slane %v972, 2
        %v974 = vadd.f32 %v972, %v973
        %v975 = vrot.slane %v974, 1
        %v976 = vadd.f32 %v974, %v975
        %v977 = vadd.f32 %v544, %v547
        %v978 = vrot.slane %v977, 4
        %v979 = vadd.f32 %v977, %v978
        %v980 = vrot.slane %v979, 2
        %v981 = vadd.f32 %v979, %v980
        %v982 = vrot.slane %v981, 1
        %v983 = vadd.f32 %v981, %v982
        %v984 = vadd.f32 %v545, %v548
        %v985 = vrot.slane %v984, 4
        %v986 = vadd.f32 %v984, %v985
        %v987 = vrot.slane %v986, 2
        %v988 = vadd.f32 %v986, %v987
        %v989 = vrot.slane %v988, 1
        %v990 = vadd.f32 %v988, %v989
        %v991 = vadd.f32 %v553, %v556
        %v992 = vrot.slane %v991, 4
        %v993 = vadd.f32 %v991, %v992
        %v994 = vrot.slane %v993, 2
        %v995 = vadd.f32 %v993, %v994
        %v996 = vrot.slane %v995, 1
        %v997 = vadd.f32 %v995, %v996
        %v998 = vadd.f32 %v554, %v557
        %v999 = vrot.slane %v998, 4
        %v1000 = vadd.f32 %v998, %v999
        %v1001 = vrot.slane %v1000, 2
        %v1002 = vadd.f32 %v1000, %v1001
        %v1003 = vrot.slane %v1002, 1
        %v1004 = vadd.f32 %v1002, %v1003
        %v1005 = vadd.f32 %v555, %v558
        %v1006 = vrot.slane %v1005, 4
        %v1007 = vadd.f32 %v1005, %v1006
        %v1008 = vrot.slane %v1007, 2
        %v1009 = vadd.f32 %v1007, %v1008
        %v1010 = vrot.slane %v1009, 1
        %v1011 = vadd.f32 %v1009, %v1010
        %v1012 = vadd.f32 %v976, %v997
        %v1013 = vadd.f32 %v983, %v1004
        %v1014 = vadd.f32 %v990, %v1011
        %v1015 = vadd.f32 %v563, %v566
        %v1016 = vrot.slane %v1015, 4
        %v1017 = vadd.f32 %v1015, %v1016
        %v1018 = vrot.slane %v1017, 2
        %v1019 = vadd.f32 %v1017, %v1018
        %v1020 = vrot.slane %v1019, 1
        %v1021 = vadd.f32 %v1019, %v1020
        %v1022 = vadd.f32 %v564, %v567
        %v1023 = vrot.slane %v1022, 4
        %v1024 = vadd.f32 %v1022, %v1023
        %v1025 = vrot.slane %v1024, 2
        %v1026 = vadd.f32 %v1024, %v1025
        %v1027 = vrot.slane %v1026, 1
        %v1028 = vadd.f32 %v1026, %v1027
        %v1029 = vadd.f32 %v565, %v568
        %v1030 = vrot.slane %v1029, 4
        %v1031 = vadd.f32 %v1029, %v1030
        %v1032 = vrot.slane %v1031, 2
        %v1033 = vadd.f32 %v1031, %v1032
        %v1034 = vrot.slane %v1033, 1
        %v1035 = vadd.f32 %v1033, %v1034
        %v1036 = vadd.f32 %v1012, %v1021
        %v1037 = vadd.f32 %v1013, %v1028
        %v1038 = vadd.f32 %v1014, %v1035
        %v1039 = vadd.f32 %v573, %v576
        %v1040 = vrot.slane %v1039, 4
        %v1041 = vadd.f32 %v1039, %v1040
        %v1042 = vrot.slane %v1041, 2
        %v1043 = vadd.f32 %v1041, %v1042
        %v1044 = vrot.slane %v1043, 1
        %v1045 = vadd.f32 %v1043, %v1044
        %v1046 = vadd.f32 %v574, %v577
        %v1047 = vrot.slane %v1046, 4
        %v1048 = vadd.f32 %v1046, %v1047
        %v1049 = vrot.slane %v1048, 2
        %v1050 = vadd.f32 %v1048, %v1049
        %v1051 = vrot.slane %v1050, 1
        %v1052 = vadd.f32 %v1050, %v1051
        %v1053 = vadd.f32 %v575, %v578
        %v1054 = vrot.slane %v1053, 4
        %v1055 = vadd.f32 %v1053, %v1054
        %v1056 = vrot.slane %v1055, 2
        %v1057 = vadd.f32 %v1055, %v1056
        %v1058 = vrot.slane %v1057, 1
        %v1059 = vadd.f32 %v1057, %v1058
        %v1060 = vadd.f32 %v1036, %v1045
        %v1061 = vadd.f32 %v1037, %v1052
        %v1062 = vadd.f32 %v1038, %v1059
        %v1063 = vld [vmem:[%s8] sm:$0xff]
        %v1064 = vld [vmem:[%s8 + $0x8] sm:$0xff]
        %v1065 = vld [vmem:[%s8 + $0x10] sm:$0xff]
        %v1066 = vld [vmem:[%s8 + $0x18] sm:$0xff]
        %v1067 = vld [vmem:[%s8 + $0x20] sm:$0xff]
        %v1068 = vld [vmem:[%s8 + $0x28] sm:$0xff]
        %v1069 = vld [vmem:[%s8 + $0x30] sm:$0xff]
        %v1070 = vld [vmem:[%s8 + $0x38] sm:$0xff]
        %v1071 = vld [vmem:[%s8 + $0x40] sm:$0xff]
        %v1072 = vld [vmem:[%s8 + $0x48] sm:$0xff]
        %v1073 = vld [vmem:[%s8 + $0x50] sm:$0xff]
        %v1074 = vld [vmem:[%s8 + $0x58] sm:$0xff]
        %v1075 = vld [vmem:[%s8 + $0x60] sm:$0xff]
        %v1076 = vld [vmem:[%s8 + $0x68] sm:$0xff]
        %v1077 = vld [vmem:[%s8 + $0x70] sm:$0xff]
        %v1078 = vld [vmem:[%s8 + $0x78] sm:$0xff]
        %v1079 = vld [vmem:[%s8 + $0x80] sm:$0xff]
        %v1080 = vld [vmem:[%s8 + $0x88] sm:$0xff]
        %v1081 = vld [vmem:[%s8 + $0x90] sm:$0xff]
        %v1082 = vld [vmem:[%s8 + $0x98] sm:$0xff]
        %v1083 = vld [vmem:[%s8 + $0xa0] sm:$0xff]
        %v1084 = vld [vmem:[%s8 + $0xa8] sm:$0xff]
        %v1085 = vld [vmem:[%s8 + $0xb0] sm:$0xff]
        %v1086 = vld [vmem:[%s8 + $0xb8] sm:$0xff]
        %v1087 = vld [vmem:[%s8 + $0xc0] sm:$0xff]
        %v1088 = vld [vmem:[%s8 + $0xc8] sm:$0xff]
        %v1089 = vld [vmem:[%s8 + $0xd0] sm:$0xff]
        %v1090 = vld [vmem:[%s8 + $0xd8] sm:$0xff]
        %v1091 = vld [vmem:[%s8 + $0xe0] sm:$0xff]
        %v1092 = vld [vmem:[%s8 + $0xe8] sm:$0xff]
        %v1093 = vld [vmem:[%s8 + $0xf0] sm:$0xff]
        %v1094 = vld [vmem:[%s8 + $0xf8] sm:$0xff]
        %v1095 = vld [vmem:[%s8 + $0x100] sm:$0xff]
        %v1096 = vld [vmem:[%s8 + $0x108] sm:$0xff]
        %v1097 = vld [vmem:[%s8 + $0x110] sm:$0xff]
        %v1098 = vld [vmem:[%s8 + $0x118] sm:$0xff]
        %v1099 = vld [vmem:[%s8 + $0x120] sm:$0xff]
        %v1100 = vld [vmem:[%s8 + $0x128] sm:$0xff]
        %v1101 = vld [vmem:[%s8 + $0x130] sm:$0xff]
        %v1102 = vld [vmem:[%s8 + $0x138] sm:$0xff]
        %v1103 = vld [vmem:[%s8 + $0x140] sm:$0xff]
        %v1104 = vld [vmem:[%s8 + $0x148] sm:$0xff]
        %v1105 = vld [vmem:[%s8 + $0x150] sm:$0xff]
        %v1106 = vld [vmem:[%s8 + $0x158] sm:$0xff]
        %v1107 = vld [vmem:[%s8 + $0x160] sm:$0xff]
        %v1108 = vld [vmem:[%s8 + $0x168] sm:$0xff]
        %v1109 = vld [vmem:[%s8 + $0x170] sm:$0xff]
        %v1110 = vld [vmem:[%s8 + $0x178] sm:$0xff]
        %1111 = vmatprep.subr.mxu0 0.0
        %1112 = vmatpush1.msra.mxu0 %v1063
        %1113 = vmatprep.subr.mxu0 0.0
        %1114 = vmatpush1.msra.mxu0 %v1064
        %1115 = vmatprep.subr.mxu0 0.0
        %1116 = vmatpush1.msra.mxu0 %v1065
        %1117 = vmatprep.subr.mxu0 0.0
        %1118 = vmatpush1.msra.mxu0 %v1066
        %1119 = vmatprep.subr.mxu0 0.0
        %1120 = vmatpush1.msra.mxu0 %v1067
        %1121 = vmatprep.subr.mxu0 0.0
        %1122 = vmatpush1.msra.mxu0 %v1068
        %1123 = vmatprep.subr.mxu0 0.0
        %1124 = vmatpush1.msra.mxu0 %v1069
        %1125 = vmatprep.subr.mxu0 0.0
        %1126 = vmatpush1.msra.mxu0 %v1070
        %1127 = vmatprep.subr.mxu0 0.0
        %1128 = vmatpush1.msra.mxu0 %v1071
        %1129 = vmatprep.subr.mxu0 0.0
        %1130 = vmatpush1.msra.mxu0 %v1072
        %1131 = vmatprep.subr.mxu0 0.0
        %1132 = vmatpush1.msra.mxu0 %v1073
        %1133 = vmatprep.subr.mxu0 0.0
        %1134 = vmatpush1.msra.mxu0 %v1074
        %1135 = vmatprep.subr.mxu0 0.0
        %1136 = vmatpush1.msra.mxu0 %v1075
        %1137 = vmatprep.subr.mxu0 0.0
        %1138 = vmatpush1.msra.mxu0 %v1076
        %1139 = vmatprep.subr.mxu0 0.0
        %1140 = vmatpush1.msra.mxu0 %v1077
        %1141 = vmatprep.subr.mxu0 0.0
        %1142 = vmatpush1.msra.mxu0 %v1078
        %1143 = vmatprep.subr.mxu0 0.0
        %1144 = vmatpush1.msra.mxu0 %v1079
        %1145 = vmatprep.subr.mxu0 0.0
        %1146 = vmatpush1.msra.mxu0 %v1080
        %1147 = vmatprep.subr.mxu0 0.0
        %1148 = vmatpush1.msra.mxu0 %v1081
        %1149 = vmatprep.subr.mxu0 0.0
        %1150 = vmatpush1.msra.mxu0 %v1082
        %1151 = vmatprep.subr.mxu0 0.0
        %1152 = vmatpush1.msra.mxu0 %v1083
        %1153 = vmatprep.subr.mxu0 0.0
        %1154 = vmatpush1.msra.mxu0 %v1084
        %1155 = vmatprep.subr.mxu0 0.0
        %1156 = vmatpush1.msra.mxu0 %v1085
        %1157 = vmatprep.subr.mxu0 0.0
        %1158 = vmatpush1.msra.mxu0 %v1086
        %1159 = vmatprep.subr.mxu0 0.0
        %1160 = vmatpush1.msra.mxu0 %v1087
        %1161 = vmatprep.subr.mxu0 0.0
        %1162 = vmatpush1.msra.mxu0 %v1088
        %1163 = vmatprep.subr.mxu0 0.0
        %1164 = vmatpush1.msra.mxu0 %v1089
        %1165 = vmatprep.subr.mxu0 0.0
        %1166 = vmatpush1.msra.mxu0 %v1090
        %1167 = vmatprep.subr.mxu0 0.0
        %1168 = vmatpush1.msra.mxu0 %v1091
        %1169 = vmatprep.subr.mxu0 0.0
        %1170 = vmatpush1.msra.mxu0 %v1092
        %1171 = vmatprep.subr.mxu0 0.0
        %1172 = vmatpush1.msra.mxu0 %v1093
        %1173 = vmatprep.subr.mxu0 0.0
        %1174 = vmatpush1.msra.mxu0 %v1094
        %1175 = vmatprep.mubr.f32.mxu0 %v1061
        %1176 = vmatmul.mubr.f32.gmra.mrb[0].mxu0 %v1060
        %v1177 = vpop.f32.mrb[0].mxu0
        %v1178 = vadd.f32 0.0, %v1177
        %v1179 = vpop.f32.mrb[0].mxu0
        %1180 = vdwg.mxu0
        %1181 = vmatprep.subr.mxu0 0.0
        %1182 = vmatpush1.msra.mxu0 %v1095
        %1183 = vmatprep.subr.mxu0 0.0
        %1184 = vmatpush1.msra.mxu0 %v1096
        %1185 = vmatprep.subr.mxu0 0.0
        %1186 = vmatpush1.msra.mxu0 %v1097
        %1187 = vmatprep.subr.mxu0 0.0
        %1188 = vmatpush1.msra.mxu0 %v1098
        %1189 = vmatprep.subr.mxu0 0.0
        %1190 = vmatpush1.msra.mxu0 %v1099
        %1191 = vmatprep.subr.mxu0 0.0
        %1192 = vmatpush1.msra.mxu0 %v1100
        %1193 = vmatprep.subr.mxu0 0.0
        %1194 = vmatpush1.msra.mxu0 %v1101
        %1195 = vmatprep.subr.mxu0 0.0
        %1196 = vmatpush1.msra.mxu0 %v1102
        %1197 = vmatprep.subr.mxu0 0.0
        %1198 = vmatpush1.msra.mxu0 %v1103
        %1199 = vmatprep.subr.mxu0 0.0
        %1200 = vmatpush1.msra.mxu0 %v1104
        %1201 = vmatprep.subr.mxu0 0.0
        %1202 = vmatpush1.msra.mxu0 %v1105
        %1203 = vmatprep.subr.mxu0 0.0
        %1204 = vmatpush1.msra.mxu0 %v1106
        %1205 = vmatprep.subr.mxu0 0.0
        %1206 = vmatpush1.msra.mxu0 %v1107
        %1207 = vmatprep.subr.mxu0 0.0
        %1208 = vmatpush1.msra.mxu0 %v1108
        %1209 = vmatprep.subr.mxu0 0.0
        %1210 = vmatpush1.msra.mxu0 %v1109
        %1211 = vmatprep.subr.mxu0 0.0
        %1212 = vmatpush1.msra.mxu0 %v1110
        %1213 = vmatprep.subr.mxu0 0.0
        %1214 = vmatpush1.msra.mxu0 0.0
        %1215 = vmatprep.subr.mxu0 0.0
        %1216 = vmatpush1.msra.mxu0 0.0
        %1217 = vmatprep.subr.mxu0 0.0
        %1218 = vmatpush1.msra.mxu0 0.0
        %1219 = vmatprep.subr.mxu0 0.0
        %1220 = vmatpush1.msra.mxu0 0.0
        %1221 = vmatprep.subr.mxu0 0.0
        %1222 = vmatpush1.msra.mxu0 0.0
        %1223 = vmatprep.subr.mxu0 0.0
        %1224 = vmatpush1.msra.mxu0 0.0
        %1225 = vmatprep.subr.mxu0 0.0
        %1226 = vmatpush1.msra.mxu0 0.0
        %1227 = vmatprep.subr.mxu0 0.0
        %1228 = vmatpush1.msra.mxu0 0.0
        %1229 = vmatprep.subr.mxu0 0.0
        %1230 = vmatpush1.msra.mxu0 0.0
        %1231 = vmatprep.subr.mxu0 0.0
        %1232 = vmatpush1.msra.mxu0 0.0
        %1233 = vmatprep.subr.mxu0 0.0
        %1234 = vmatpush1.msra.mxu0 0.0
        %1235 = vmatprep.subr.mxu0 0.0
        %1236 = vmatpush1.msra.mxu0 0.0
        %1237 = vmatprep.subr.mxu0 0.0
        %1238 = vmatpush1.msra.mxu0 0.0
        %1239 = vmatprep.subr.mxu0 0.0
        %1240 = vmatpush1.msra.mxu0 0.0
        %1241 = vmatprep.subr.mxu0 0.0
        %1242 = vmatpush1.msra.mxu0 0.0
        %1243 = vmatprep.subr.mxu0 0.0
        %1244 = vmatpush1.msra.mxu0 0.0
        %1245 = vmatprep.mubr.f32.mxu0 0.0
        %1246 = vmatmul.mubr.f32.gmra.mrb[0].mxu0 %v1062
        %v1247 = vpop.f32.mrb[0].mxu0
        %v1248 = vadd.f32 %v1178, %v1247
        %v1249 = vpop.f32.mrb[0].mxu0
        %1250 = vdwg.mxu0
        %v1251 = vmul.f32 %v1248, 0.00390625
        %v1252 = vld [vmem:[%s9] sm:$0xff]
        %v1253 = vld [vmem:[%s9 + $0x8] sm:$0xff]
        %v1254 = vld [vmem:[%s9 + $0x10] sm:$0xff]
        %v1255 = vld [vmem:[%s9 + $0x18] sm:$0xff]
        %v1256 = vld [vmem:[%s10] sm:$0x1]
        %vm1257 = vcmask 261120
        %v1259 = vsel %vm1257, %v1251, 0
        %1261 = vmatprep.subr.mxu0 0.0
        %1262 = vmatpush1.msra.mxu0 %v1252
        %1263 = vmatprep.subr.mxu0 0.0
        %1264 = vmatpush1.msra.mxu0 %v1253
        %1265 = vmatprep.subr.mxu0 0.0
        %1266 = vmatpush1.msra.mxu0 %v1254
        %1267 = vmatprep.subr.mxu0 0.0
        %1268 = vmatpush1.msra.mxu0 %v1255
        %1269 = vmatprep.subr.mxu0 0.0
        %1270 = vmatpush1.msra.mxu0 0.0
        %1271 = vmatprep.subr.mxu0 0.0
        %1272 = vmatpush1.msra.mxu0 0.0
        %1273 = vmatprep.subr.mxu0 0.0
        %1274 = vmatpush1.msra.mxu0 0.0
        %1275 = vmatprep.subr.mxu0 0.0
        %1276 = vmatpush1.msra.mxu0 0.0
        %1277 = vmatprep.subr.mxu0 0.0
        %1278 = vmatpush1.msra.mxu0 0.0
        %1279 = vmatprep.subr.mxu0 0.0
        %1280 = vmatpush1.msra.mxu0 0.0
        %1281 = vmatprep.subr.mxu0 0.0
        %1282 = vmatpush1.msra.mxu0 0.0
        %1283 = vmatprep.subr.mxu0 0.0
        %1284 = vmatpush1.msra.mxu0 0.0
        %1285 = vmatprep.subr.mxu0 0.0
        %1286 = vmatpush1.msra.mxu0 0.0
        %1287 = vmatprep.subr.mxu0 0.0
        %1288 = vmatpush1.msra.mxu0 0.0
        %1289 = vmatprep.subr.mxu0 0.0
        %1290 = vmatpush1.msra.mxu0 0.0
        %1291 = vmatprep.subr.mxu0 0.0
        %1292 = vmatpush1.msra.mxu0 0.0
        %1293 = vmatprep.subr.mxu0 0.0
        %1294 = vmatpush1.msra.mxu0 0.0
        %1295 = vmatprep.subr.mxu0 0.0
        %1296 = vmatpush1.msra.mxu0 0.0
        %1297 = vmatprep.subr.mxu0 0.0
        %1298 = vmatpush1.msra.mxu0 0.0
        %1299 = vmatprep.subr.mxu0 0.0
        %1300 = vmatpush1.msra.mxu0 0.0
        %1301 = vmatprep.subr.mxu0 0.0
        %1302 = vmatpush1.msra.mxu0 0.0
        %1303 = vmatprep.subr.mxu0 0.0
        %1304 = vmatpush1.msra.mxu0 0.0
        %1305 = vmatprep.subr.mxu0 0.0
        %1306 = vmatpush1.msra.mxu0 0.0
        %1307 = vmatprep.subr.mxu0 0.0
        %1308 = vmatpush1.msra.mxu0 0.0
        %1309 = vmatprep.subr.mxu0 0.0
        %1310 = vmatpush1.msra.mxu0 0.0
        %1311 = vmatprep.subr.mxu0 0.0
        %1312 = vmatpush1.msra.mxu0 0.0
        %1313 = vmatprep.subr.mxu0 0.0
        %1314 = vmatpush1.msra.mxu0 0.0
        %1315 = vmatprep.subr.mxu0 0.0
        %1316 = vmatpush1.msra.mxu0 0.0
        %1317 = vmatprep.subr.mxu0 0.0
        %1318 = vmatpush1.msra.mxu0 0.0
        %1319 = vmatprep.subr.mxu0 0.0
        %1320 = vmatpush1.msra.mxu0 0.0
        %1321 = vmatprep.subr.mxu0 0.0
        %1322 = vmatpush1.msra.mxu0 0.0
        %1323 = vmatprep.subr.mxu0 0.0
        %1324 = vmatpush1.msra.mxu0 0.0
        %1325 = vmatprep.mubr.f32.mxu0 0.0
        %1326 = vmatmul.mubr.f32.gmra.mrb[0].mxu0 %v1259
        %v1327 = vpop.f32.mrb[0].mxu0
        %v1328 = vadd.f32 %v1256, %v1327
        %v1329 = vpop.f32.mrb[0].mxu0
        %1330 = vdwg.mxu0
        %v1331 = vmax.f32 %v1328, 0.0
        %v1332 = vld [vmem:[%s11] sm:$0xff]
        %v1333 = vld [vmem:[%s12] sm:$0x1]
        %vm1334 = vcmask 64512
        %v1336 = vsel %vm1334, %v1331, 0
        %1338 = vmatprep.subr.mxu0 0.0
        %1339 = vmatpush1.msra.mxu0 %v1332
        %1340 = vmatprep.subr.mxu0 0.0
        %1341 = vmatpush1.msra.mxu0 0.0
        %1342 = vmatprep.subr.mxu0 0.0
        %1343 = vmatpush1.msra.mxu0 0.0
        %1344 = vmatprep.subr.mxu0 0.0
        %1345 = vmatpush1.msra.mxu0 0.0
        %1346 = vmatprep.subr.mxu0 0.0
        %1347 = vmatpush1.msra.mxu0 0.0
        %1348 = vmatprep.subr.mxu0 0.0
        %1349 = vmatpush1.msra.mxu0 0.0
        %1350 = vmatprep.subr.mxu0 0.0
        %1351 = vmatpush1.msra.mxu0 0.0
        %1352 = vmatprep.subr.mxu0 0.0
        %1353 = vmatpush1.msra.mxu0 0.0
        %1354 = vmatprep.subr.mxu0 0.0
        %1355 = vmatpush1.msra.mxu0 0.0
        %1356 = vmatprep.subr.mxu0 0.0
        %1357 = vmatpush1.msra.mxu0 0.0
        %1358 = vmatprep.subr.mxu0 0.0
        %1359 = vmatpush1.msra.mxu0 0.0
        %1360 = vmatprep.subr.mxu0 0.0
        %1361 = vmatpush1.msra.mxu0 0.0
        %1362 = vmatprep.subr.mxu0 0.0
        %1363 = vmatpush1.msra.mxu0 0.0
        %1364 = vmatprep.subr.mxu0 0.0
        %1365 = vmatpush1.msra.mxu0 0.0
        %1366 = vmatprep.subr.mxu0 0.0
        %1367 = vmatpush1.msra.mxu0 0.0
        %1368 = vmatprep.subr.mxu0 0.0
        %1369 = vmatpush1.msra.mxu0 0.0
        %1370 = vmatprep.subr.mxu0 0.0
        %1371 = vmatpush1.msra.mxu0 0.0
        %1372 = vmatprep.subr.mxu0 0.0
        %1373 = vmatpush1.msra.mxu0 0.0
        %1374 = vmatprep.subr.mxu0 0.0
        %1375 = vmatpush1.msra.mxu0 0.0
        %1376 = vmatprep.subr.mxu0 0.0
        %1377 = vmatpush1.msra.mxu0 0.0
        %1378 = vmatprep.subr.mxu0 0.0
        %1379 = vmatpush1.msra.mxu0 0.0
        %1380 = vmatprep.subr.mxu0 0.0
        %1381 = vmatpush1.msra.mxu0 0.0
        %1382 = vmatprep.subr.mxu0 0.0
        %1383 = vmatpush1.msra.mxu0 0.0
        %1384 = vmatprep.subr.mxu0 0.0
        %1385 = vmatpush1.msra.mxu0 0.0
        %1386 = vmatprep.subr.mxu0 0.0
        %1387 = vmatpush1.msra.mxu0 0.0
        %1388 = vmatprep.subr.mxu0 0.0
        %1389 = vmatpush1.msra.mxu0 0.0
        %1390 = vmatprep.subr.mxu0 0.0
        %1391 = vmatpush1.msra.mxu0 0.0
        %1392 = vmatprep.subr.mxu0 0.0
        %1393 = vmatpush1.msra.mxu0 0.0
        %1394 = vmatprep.subr.mxu0 0.0
        %1395 = vmatpush1.msra.mxu0 0.0
        %1396 = vmatprep.subr.mxu0 0.0
        %1397 = vmatpush1.msra.mxu0 0.0
        %1398 = vmatprep.subr.mxu0 0.0
        %1399 = vmatpush1.msra.mxu0 0.0
        %1400 = vmatprep.subr.mxu0 0.0
        %1401 = vmatpush1.msra.mxu0 0.0
        %1402 = vmatprep.mubr.f32.mxu0 0.0
        %1403 = vmatmul.mubr.f32.gmra.mrb[0].mxu0 %v1336
        %v1404 = vpop.f32.mrb[0].mxu0
        %v1405 = vadd.f32 %v1333, %v1404
        %v1406 = vpop.f32.mrb[0].mxu0
        %1407 = vdwg.mxu0
        %v1408 = vxor.u32 %v1405, 2147483648
        %v1409 = vmul.f32 %v1408, 1.442695
        %v1410 = vpow.pop %v1409
        %v1411 = vadd.f32 %v1410, 1.0
        %v1412 = vrcp.pop %v1411
        %v1413 = vmul.f32 1.0, %v1412
        %v1414 = vmul.f32 %v1251, %v1413
        %vm1415 = vcmask 253952
        %1416 = vst.msk [vmem:[%s512] sm:$0x1] %vm1415, %v1414
        %p1417 = scmp.lt.s32.totalorder %s29, 1
        %s1418 = scalar_select %p1417, %s29, 1
        %s1419 = smul.addr %s1418, 4
        %s1420 = smul.addr %s1419, 8
        %s1421 = scalar_lea.vmem %s13, %s1420
        %s1422 = sand.u32 %s356, 1
        %s1423 = scalar_lea.sflag [#allocation3], %s1422
        %s1424 = sand.u32 %s356, 1
        %s1425 = scalar_lea.vmem [#allocation2], %s1424
        // Predicated region
        $region73: #{_forward_s2_impl.1} parent=71 // pred_check
          %p1426 = pneg %p340
        $region74: #{_forward_s2_impl.1} parent=71 // pred_check_branch
          %1428 = sbr.rel (%p1426) target = $region76
        $region75: #{_forward_s2_impl.1} parent=71 // pred_region
          _
        $region76: #{_forward_s2_impl.1} parent=71 // pred_fallthru
          _
        // Predicated region
        $region77: #{_forward_s2_impl.1} parent=71 // pred_check
          %p1429 = pneg %p366
        $region78: #{_forward_s2_impl.1} parent=71 // pred_check_branch
          %1431 = sbr.rel (%p1429) target = $region80
        $region79: #{_forward_s2_impl.1} parent=71 // pred_region
          %s1433 = ssub.s32 16, 16
          %1434 = vsyncadd %s1423, %s1433
          %s1435 = smul.addr %s29, 16
          %s1436 = scalar_lea.hbm %s14, %s1435
          %s1438 = sshll.u32 %s1425, 4
          %s1439 = int_to_ptr.vmem [resolvable:$true] %s1438
          %1441 = dma.vmem_to_hbm [thread:$0]  %s1439, 16, %s1436, %s1423
        $region80: #{_forward_s2_impl.1} parent=71 // pred_fallthru
          _
      $region72: #{_forward_s2_impl.1} parent=5 // pred_fallthru
        _
      %p1442 = scmp.le.s32.totalorder 2, %s24
      // Predicated region
      $region81: #{_forward_s2_impl.1} parent=5 // pred_check
        %p1443 = pneg %p1442
      $region82: #{_forward_s2_impl.1} parent=5 // pred_check_branch
        %1445 = sbr.rel (%p1443) target = $region84
      $region83: #{_forward_s2_impl.1} parent=5 // pred_region
        %s1446 = ssub.s32 %s24, 2
        // Predicated region
        $region85: #{_forward_s2_impl.1} parent=83 // pred_check
          %p1447 = pneg %p346
        $region86: #{_forward_s2_impl.1} parent=83 // pred_check_branch
          %1449 = sbr.rel (%p1447) target = $region88
        $region87: #{_forward_s2_impl.1} parent=83 // pred_region
          %p1450 = scmp.lt.s32.totalorder %s30, 1
          %s1451 = scalar_select %p1450, %s30, 1
          %s1452 = smul.addr %s1451, 4
          %s1453 = smul.addr %s1452, 8
          %s1454 = scalar_lea.vmem %s13, %s1453
        $region88: #{_forward_s2_impl.1} parent=83 // pred_fallthru
          _
        // Predicated region
        $region89: #{_forward_s2_impl.1} parent=83 // pred_check
          %p1455 = pneg %p372
        $region90: #{_forward_s2_impl.1} parent=83 // pred_check_branch
          %1457 = sbr.rel (%p1455) target = $region92
        $region91: #{_forward_s2_impl.1} parent=83 // pred_region
          %s1458 = sand.u32 %s357, 1
          %s1459 = scalar_lea.sflag [#allocation3], %s1458
          %s1460 = sand.u32 %s357, 1
          %s1461 = scalar_lea.vmem [#allocation2], %s1460
          %1462 = dma.done %s1459, 16
        $region92: #{_forward_s2_impl.1} parent=83 // pred_fallthru
          _
      $region84: #{_forward_s2_impl.1} parent=5 // pred_fallthru
        _
    $region6: #{_forward_s2_impl.1} parent=1 // loop_footer
      %s28 = sadd.s32 1, %s24
    $region7: #{_forward_s2_impl.1} parent=1 // loop_footer_branch
      %23 = sbr.rel target = $region3
    $region8: #{_forward_s2_impl.1} parent=1 // loop_exit
      _
    %1463 = vsyncpa [#allocation3], 1
    %s1464 = scalar_lea.sflag [#allocation3], 1
    %1465 = vsyncpa %s1464, 1

</llo_original>
